<compile_context>
chip_gen: v6e
topology: v6e:2x2x1
jax: 0.10.0
libtpu: 0.0.40
codegen_flags: <defaults>
</compile_context>

<pallas_src>
import math

import jax
import jax.numpy as jnp
from jax import lax
from jax.experimental import pallas as pl
from jax.experimental.pallas import tpu as pltpu

# ---------------- configuration (small, consistent with the module) -------------
BATCH       = 8
ACTION_SIZE = 8
N_CATEG     = 4          # args['n_categoricals']
N_CLASSES   = 8          # args['n_classes']
STOCH_SIZE  = N_CATEG * N_CLASSES     # 32
DETER_SIZE  = 64         # args['deterministic_size']
HIDDEN      = 32         # hidden_size
FF_DIM      = 64         # feed-forward width inside each attention block
N_LAYERS    = 2          # args['attention_layers']
LN_EPS      = 1e-5

# packed output layout: [logits(32) | stoch one-hot(32) | deter(64)] = 128 lanes
PACK_W = 2 * STOCH_SIZE + DETER_SIZE
assert PACK_W == 128

# rows of the packed bias/LayerNorm slab (each row padded to 128 lanes)
ROW_B_IN        = 0
ROW_ATTN        = 1            # 7 rows per layer: b_attn, ln1g, ln1b, bf1, bf2, ln2g, ln2b
ROWS_PER_LAYER  = 7
ROW_GRU         = ROW_ATTN + ROWS_PER_LAYER * N_LAYERS   # b_r, b_z, b_ih_n, b_hh_n
ROW_BP1         = ROW_GRU + 4
ROW_BP2         = ROW_GRU + 5
N_VEC_ROWS      = ROW_GRU + 6


def _layer_norm(x, g, b):
    mu = jnp.mean(x, axis=-1, keepdims=True)
    var = jnp.mean((x - mu) ** 2, axis=-1, keepdims=True)
    return (x - mu) * lax.rsqrt(var + LN_EPS) * g + b


# --------------------------------- kernel ---------------------------------------
def rssm_transition_kernel(a_ref, z_ref, h_ref, vec_ref, w_in_ref, attn_w_ref,
                           wf1_ref, wf2_ref, w_ihg_ref, w_hhg_ref,
                           wp1_ref, wp2_ref, out_ref):
    f32 = jnp.float32

    def vec(row, width):                       # (1, width) bias/LN row, broadcasts over batch
        return vec_ref[row:row + 1, :width]

    a = a_ref[...]                             # (TB, ACTION_SIZE)
    z = z_ref[...]                             # (TB, STOCH_SIZE)
    h = h_ref[...]                             # (TB, DETER_SIZE)

    # ---- _rnn_input_model: Linear(concat(a, z)) + ReLU --------------------------
    # concat(a, z) @ W == a @ W[:A] + z @ W[A:]  (row slice at 8 = sublane-aligned view)
    y = (jnp.dot(a, w_in_ref[:ACTION_SIZE, :], preferred_element_type=f32)
         + jnp.dot(z, w_in_ref[ACTION_SIZE:, :], preferred_element_type=f32)
         + vec(ROW_B_IN, HIDDEN))
    y = jnp.maximum(y, 0.0)

    # ---- _attention_stack over a length-1 token sequence ------------------------
    # TODO(synk): AttentionEncoder source not provided; standard post-LN block used.
    # softmax over one key == 1 exactly => context == V; q/k projections removed and
    # wv@wo (+ bv@wo + bo) folded offline into attn_w / its bias row. dropout=0.1 is
    # inactive at inference (identity).
    for l in range(N_LAYERS):
        base = ROW_ATTN + ROWS_PER_LAYER * l
        attn_out = (jnp.dot(y, attn_w_ref[l], preferred_element_type=f32)
                    + vec(base + 0, HIDDEN))
        y = _layer_norm(y + attn_out, vec(base + 1, HIDDEN), vec(base + 2, HIDDEN))
        ff = jnp.maximum(jnp.dot(y, wf1_ref[l], preferred_element_type=f32)
                         + vec(base + 3, FF_DIM), 0.0)
        ff = jnp.dot(ff, wf2_ref[l], preferred_element_type=f32) + vec(base + 4, HIDDEN)
        y = _layer_norm(y + ff, vec(base + 5, HIDDEN), vec(base + 6, HIDDEN))

    # ---- _cell: single-step GRU, per-gate matmuls (PyTorch gate order r, z, n) ---
    r = jax.nn.sigmoid(jnp.dot(y, w_ihg_ref[0], preferred_element_type=f32)
                       + jnp.dot(h, w_hhg_ref[0], preferred_element_type=f32)
                       + vec(ROW_GRU + 0, DETER_SIZE))
    zt = jax.nn.sigmoid(jnp.dot(y, w_ihg_ref[1], preferred_element_type=f32)
                        + jnp.dot(h, w_hhg_ref[1], preferred_element_type=f32)
                        + vec(ROW_GRU + 1, DETER_SIZE))
    n = jnp.tanh(jnp.dot(y, w_ihg_ref[2], preferred_element_type=f32)
                 + vec(ROW_GRU + 2, DETER_SIZE)
                 + r * (jnp.dot(h, w_hhg_ref[2], preferred_element_type=f32)
                        + vec(ROW_GRU + 3, DETER_SIZE)))
    h_new = (1.0 - zt) * n + zt * h

    # ---- _stochastic_prior_model: deter -> hidden (ReLU) -> logits --------------
    ph = jnp.maximum(jnp.dot(h_new, wp1_ref[...], preferred_element_type=f32)
                     + vec(ROW_BP1, HIDDEN), 0.0)
    logits = jnp.dot(ph, wp2_ref[...], preferred_element_type=f32) + vec(ROW_BP2, STOCH_SIZE)

    # TODO(synk): OneHotCategorical *sampling* is stochastic; deterministic mode
    # (argmax one-hot per categorical, first max on ties) is emitted instead.
    pieces = [logits]
    for c in range(N_CATEG):
        lg = logits[:, c * N_CLASSES:(c + 1) * N_CLASSES]
        m = jnp.max(lg, axis=-1, keepdims=True)
        iota = lax.broadcasted_iota(jnp.int32, lg.shape, 1)
        first = jnp.min(jnp.where(lg == m, iota, N_CLASSES), axis=-1, keepdims=True)
        pieces.append((iota == first).astype(f32))
    pieces.append(h_new)

    # single lane-dense 128-wide unmasked store: [logits | stoch | deter]
    out_ref[...] = jnp.concatenate(pieces, axis=-1)


# ------------------------------- wrapper -----------------------------------------
def _full_spec(shape):
    nd = len(shape)
    return pl.BlockSpec(shape, lambda i, _nd=nd: (0,) * _nd)


def _round_up(n, m):
    return ((n + m - 1) // m) * m


def pack_params(p):
    """One-time repack (hoist outside any rollout loop): fuse wv@wo, split GRU gates,
    and pack every bias/LayerNorm vector into a single (N_VEC_ROWS, 128) slab."""
    # fused attention projection: (y@wv + bv)@wo + bo == y@(wv@wo) + (bv@wo + bo)
    attn_w = jnp.einsum("lij,ljk->lik", p["wv"], p["wo"])                    # (L,H,H)
    attn_b = jnp.einsum("lij,ljk->lik", p["bv"], p["wo"]) + p["bo"]          # (L,1,H)

    D = DETER_SIZE
    w_ihg = jnp.stack([p["w_ih"][:, g * D:(g + 1) * D] for g in range(3)])   # (3,H,D)
    w_hhg = jnp.stack([p["w_hh"][:, g * D:(g + 1) * D] for g in range(3)])   # (3,D,D)
    b_r = p["b_ih"][:, 0:D] + p["b_hh"][:, 0:D]
    b_z = p["b_ih"][:, D:2 * D] + p["b_hh"][:, D:2 * D]
    b_ih_n = p["b_ih"][:, 2 * D:3 * D]
    b_hh_n = p["b_hh"][:, 2 * D:3 * D]

    def pad_row(v):
        v = jnp.ravel(v)
        return jnp.pad(v, (0, PACK_W - v.shape[0]))

    rows = [p["b_in"]]
    for l in range(N_LAYERS):
        rows += [attn_b[l], p["ln1g"][l], p["ln1b"][l], p["bf1"][l],
                 p["bf2"][l], p["ln2g"][l], p["ln2b"][l]]
    rows += [b_r, b_z, b_ih_n, b_hh_n, p["bp1"], p["bp2"]]
    vec_slab = jnp.stack([pad_row(r) for r in rows])                         # (21,128)
    assert vec_slab.shape == (N_VEC_ROWS, PACK_W)

    return (vec_slab, p["w_in"], attn_w, p["wf1"], p["wf2"], w_ihg, w_hhg,
            p["wp1"], p["wp2"])


def rssm_transition(prev_actions, prev_stoch, prev_deter, packed):
    B = prev_actions.shape[0]
    # pad batch to a sublane-friendly multiple so any batch size runs; tile at <=128
    Bp = _round_up(B, 8)
    TB = min(Bp, 128)
    Bp = _round_up(Bp, TB)
    if Bp != B:
        pad = Bp - B
        prev_actions = jnp.pad(prev_actions, ((0, pad), (0, 0)))
        prev_stoch   = jnp.pad(prev_stoch,   ((0, pad), (0, 0)))
        prev_deter   = jnp.pad(prev_deter,   ((0, pad), (0, 0)))

    in_specs = [
        pl.BlockSpec((TB, ACTION_SIZE), lambda i: (i, 0)),
        pl.BlockSpec((TB, STOCH_SIZE), lambda i: (i, 0)),
        pl.BlockSpec((TB, DETER_SIZE), lambda i: (i, 0)),
    ] + [_full_spec(w.shape) for w in packed]

    out = pl.pallas_call(
        rssm_transition_kernel,
        out_shape=jax.ShapeDtypeStruct((Bp, PACK_W), jnp.float32),
        grid=(Bp // TB,),
        in_specs=in_specs,
        out_specs=pl.BlockSpec((TB, PACK_W), lambda i: (i, 0)),
        compiler_params=pltpu.CompilerParams(dimension_semantics=("parallel",)),
    )(prev_actions, prev_stoch, prev_deter, *packed)

    out = out[:B]
    logits = out[:, :STOCH_SIZE].reshape(B, N_CATEG, N_CLASSES)
    stoch  = out[:, STOCH_SIZE:2 * STOCH_SIZE]
    deter  = out[:, 2 * STOCH_SIZE:]
    return logits, stoch, deter


# ------------------------------ parameters ---------------------------------------
def init_params(key):
    """Deterministic synthetic weights (PyTorch-default-style uniform fan-in init)."""
    keys = iter(jax.random.split(key, 64))

    def uni(fan_in, shape):
        bound = 1.0 / math.sqrt(fan_in)
        return jax.random.uniform(next(keys), shape, jnp.float32, -bound, bound)

    p = {}
    in_dim = ACTION_SIZE + STOCH_SIZE
    p["w_in"] = uni(in_dim, (in_dim, HIDDEN))
    p["b_in"] = uni(in_dim, (1, HIDDEN))

    def stackw(fan_in, shape):
        return jnp.stack([uni(fan_in, shape) for _ in range(N_LAYERS)])

    # wq/wk/bq/bk intentionally omitted: with a length-1 token sequence the softmax
    # over one key is identically 1, so the q/k path never affects the output.
    p["wv"] = stackw(HIDDEN, (HIDDEN, HIDDEN)); p["bv"] = stackw(HIDDEN, (1, HIDDEN))
    p["wo"] = stackw(HIDDEN, (HIDDEN, HIDDEN)); p["bo"] = stackw(HIDDEN, (1, HIDDEN))
    p["ln1g"] = jnp.ones((N_LAYERS, 1, HIDDEN), jnp.float32)
    p["ln1b"] = jnp.zeros((N_LAYERS, 1, HIDDEN), jnp.float32)
    p["wf1"] = stackw(HIDDEN, (HIDDEN, FF_DIM)); p["bf1"] = stackw(HIDDEN, (1, FF_DIM))
    p["wf2"] = stackw(FF_DIM, (FF_DIM, HIDDEN)); p["bf2"] = stackw(FF_DIM, (1, HIDDEN))
    p["ln2g"] = jnp.ones((N_LAYERS, 1, HIDDEN), jnp.float32)
    p["ln2b"] = jnp.zeros((N_LAYERS, 1, HIDDEN), jnp.float32)

    # GRU (stored transposed relative to torch: (in, 3*D)/(D, 3*D), columns [r|z|n])
    p["w_ih"] = uni(DETER_SIZE, (HIDDEN, 3 * DETER_SIZE))
    p["w_hh"] = uni(DETER_SIZE, (DETER_SIZE, 3 * DETER_SIZE))
    p["b_ih"] = uni(DETER_SIZE, (1, 3 * DETER_SIZE))
    p["b_hh"] = uni(DETER_SIZE, (1, 3 * DETER_SIZE))

    # DiscreteLatentDist: Linear(D, H) -> ReLU -> Linear(H, n_cat * n_classes)
    p["wp1"] = uni(DETER_SIZE, (DETER_SIZE, HIDDEN))
    p["bp1"] = uni(DETER_SIZE, (1, HIDDEN))
    p["wp2"] = uni(HIDDEN, (HIDDEN, STOCH_SIZE))
    p["bp2"] = uni(HIDDEN, (1, STOCH_SIZE))
    return p


# ----------------------- pure-JAX reference (unfused) -----------------------------
def reference_forward(prev_actions, prev_stoch, prev_deter, p):
    x = jnp.concatenate([prev_actions, prev_stoch], -1)
    y = jnp.maximum(x @ p["w_in"] + p["b_in"], 0.0)
    for l in range(N_LAYERS):
        v = y @ p["wv"][l] + p["bv"][l]               # softmax over 1 key == 1 -> ctx == v
        y = _layer_norm(y + (v @ p["wo"][l] + p["bo"][l]), p["ln1g"][l], p["ln1b"][l])
        ff = jnp.maximum(y @ p["wf1"][l] + p["bf1"][l], 0.0)
        y = _layer_norm(y + (ff @ p["wf2"][l] + p["bf2"][l]), p["ln2g"][l], p["ln2b"][l])
    gi = y @ p["w_ih"] + p["b_ih"]
    gh = prev_deter @ p["w_hh"] + p["b_hh"]
    D = DETER_SIZE
    r = jax.nn.sigmoid(gi[:, :D] + gh[:, :D])
    z = jax.nn.sigmoid(gi[:, D:2 * D] + gh[:, D:2 * D])
    n = jnp.tanh(gi[:, 2 * D:] + r * gh[:, 2 * D:])
    h = (1.0 - z) * n + z * prev_deter
    ph = jnp.maximum(h @ p["wp1"] + p["bp1"], 0.0)
    logits = ph @ p["wp2"] + p["bp2"]
    lg3 = logits.reshape(-1, N_CATEG, N_CLASSES)
    stoch = jax.nn.one_hot(jnp.argmax(lg3, -1), N_CLASSES,
                           dtype=jnp.float32).reshape(-1, STOCH_SIZE)
    return lg3, stoch, h


if __name__ == "__main__":
    key = jax.random.PRNGKey(0)
    k_a, k_z, k_h, k_p = jax.random.split(key, 4)
    prev_actions = jax.random.normal(k_a, (BATCH, ACTION_SIZE), jnp.float32)
    prev_stoch   = jax.random.normal(k_z, (BATCH, STOCH_SIZE), jnp.float32)
    prev_deter   = jax.random.normal(k_h, (BATCH, DETER_SIZE), jnp.float32)
    params = init_params(k_p)
    packed = pack_params(params)     # one-time repack; hoist outside any rollout loop

    logits, stoch, deter = rssm_transition(prev_actions, prev_stoch, prev_deter, packed)
    jax.block_until_ready((logits, stoch, deter))

    assert logits.shape == (BATCH, N_CATEG, N_CLASSES)
    assert stoch.shape == (BATCH, STOCH_SIZE)
    assert deter.shape == (BATCH, DETER_SIZE)

    ref_logits, ref_stoch, ref_deter = reference_forward(
        prev_actions, prev_stoch, prev_deter, params)
    assert jnp.allclose(logits, ref_logits, atol=1e-3, rtol=1e-3)
    assert jnp.allclose(deter, ref_deter, atol=1e-3, rtol=1e-3)
    assert jnp.allclose(stoch, ref_stoch, atol=1e-3, rtol=1e-3)
    print("KERNEL_OK")
</pallas_src>

<mosaic_0001>
module attributes {stable_mosaic.version = 11 : i64} {
  func.func @rssm_transition_kernel(%arg0: i32, %arg1: memref<8x8xf32, #tpu.memory_space<vmem>>, %arg2: memref<8x32xf32, #tpu.memory_space<vmem>>, %arg3: memref<8x64xf32, #tpu.memory_space<vmem>>, %arg4: memref<21x128xf32, #tpu.memory_space<vmem>>, %arg5: memref<40x32xf32, #tpu.memory_space<vmem>>, %arg6: memref<2x32x32xf32, #tpu.memory_space<vmem>>, %arg7: memref<2x32x64xf32, #tpu.memory_space<vmem>>, %arg8: memref<2x64x32xf32, #tpu.memory_space<vmem>>, %arg9: memref<3x32x64xf32, #tpu.memory_space<vmem>>, %arg10: memref<3x64x64xf32, #tpu.memory_space<vmem>>, %arg11: memref<64x32xf32, #tpu.memory_space<vmem>>, %arg12: memref<32x32xf32, #tpu.memory_space<vmem>>, %arg13: memref<8x128xf32, #tpu.memory_space<vmem>>) attributes {dimension_semantics = [#tpu.dimension_semantics<parallel>], iteration_bounds = array<i64: 1>, scalar_prefetch = 0 : i64, scratch_operands = 0 : i64, tpu.core_type = #tpu.core_type<tc>, window_params = [{transform_indices = @transform_0, window_bounds = array<i64: 8, 8>}, {transform_indices = @transform_1, window_bounds = array<i64: 8, 32>}, {transform_indices = @transform_2, window_bounds = array<i64: 8, 64>}, {pipeline_mode = #tpu.pipeline_mode<synchronous>, transform_indices = @transform_3, window_bounds = array<i64: 21, 128>}, {pipeline_mode = #tpu.pipeline_mode<synchronous>, transform_indices = @transform_4, window_bounds = array<i64: 40, 32>}, {pipeline_mode = #tpu.pipeline_mode<synchronous>, transform_indices = @transform_5, window_bounds = array<i64: 2, 32, 32>}, {pipeline_mode = #tpu.pipeline_mode<synchronous>, transform_indices = @transform_6, window_bounds = array<i64: 2, 32, 64>}, {pipeline_mode = #tpu.pipeline_mode<synchronous>, transform_indices = @transform_7, window_bounds = array<i64: 2, 64, 32>}, {pipeline_mode = #tpu.pipeline_mode<synchronous>, transform_indices = @transform_8, window_bounds = array<i64: 3, 32, 64>}, {pipeline_mode = #tpu.pipeline_mode<synchronous>, transform_indices = @transform_9, window_bounds = array<i64: 3, 64, 64>}, {pipeline_mode = #tpu.pipeline_mode<synchronous>, transform_indices = @transform_10, window_bounds = array<i64: 64, 32>}, {pipeline_mode = #tpu.pipeline_mode<synchronous>, transform_indices = @transform_11, window_bounds = array<i64: 32, 32>}, {transform_indices = @transform_12, window_bounds = array<i64: 8, 128>}]} {
    %c0 = arith.constant 0 : index
    %c0_0 = arith.constant 0 : index
    %0 = vector.load %arg1[%c0, %c0_0] : memref<8x8xf32, #tpu.memory_space<vmem>>, vector<8x8xf32>
    %c0_1 = arith.constant 0 : index
    %c0_2 = arith.constant 0 : index
    %1 = vector.load %arg2[%c0_1, %c0_2] : memref<8x32xf32, #tpu.memory_space<vmem>>, vector<8x32xf32>
    %c0_3 = arith.constant 0 : index
    %c0_4 = arith.constant 0 : index
    %2 = vector.load %arg3[%c0_3, %c0_4] : memref<8x64xf32, #tpu.memory_space<vmem>>, vector<8x64xf32>
    %c0_5 = arith.constant 0 : index
    %c0_6 = arith.constant 0 : index
    %3 = vector.load %arg5[%c0_5, %c0_6] : memref<40x32xf32, #tpu.memory_space<vmem>>, vector<8x32xf32>
    %cst = arith.constant dense<0.000000e+00> : vector<8x32xf32>
    %4 = tpu.matmul %0, %3, %cst {dimension_numbers = #tpu.dot_dimension_numbers<[1], [0], [0], [1], [0, 0, 1, 1], [], []>} : vector<8x8xf32>, vector<8x32xf32>, vector<8x32xf32> -> vector<8x32xf32>
    %c8 = arith.constant 8 : index
    %c0_7 = arith.constant 0 : index
    %5 = vector.load %arg5[%c8, %c0_7] : memref<40x32xf32, #tpu.memory_space<vmem>>, vector<32x32xf32>
    %cst_8 = arith.constant dense<0.000000e+00> : vector<8x32xf32>
    %6 = tpu.matmul %1, %5, %cst_8 {dimension_numbers = #tpu.dot_dimension_numbers<[1], [0], [0], [1], [0, 0, 1, 1], [], []>} : vector<8x32xf32>, vector<32x32xf32>, vector<8x32xf32> -> vector<8x32xf32>
    %7 = arith.addf %4, %6 : vector<8x32xf32>
    %c0_9 = arith.constant 0 : index
    %c0_10 = arith.constant 0 : index
    %8 = vector.load %arg4[%c0_9, %c0_10] : memref<21x128xf32, #tpu.memory_space<vmem>>, vector<1x32xf32>
    %9 = vector.broadcast %8 : vector<1x32xf32> to vector<8x32xf32>
    %10 = arith.addf %7, %9 : vector<8x32xf32>
    %cst_11 = arith.constant 0.000000e+00 : f32
    %11 = vector.broadcast %cst_11 : f32 to vector<8x32xf32>
    %12 = arith.maximumf %10, %11 : vector<8x32xf32>
    %c0_12 = arith.constant 0 : index
    %c0_13 = arith.constant 0 : index
    %c0_14 = arith.constant 0 : index
    %13 = vector.load %arg6[%c0_12, %c0_13, %c0_14] : memref<2x32x32xf32, #tpu.memory_space<vmem>>, vector<1x32x32xf32>
    %14 = vector.shape_cast %13 : vector<1x32x32xf32> to vector<32x32xf32>
    %cst_15 = arith.constant dense<0.000000e+00> : vector<8x32xf32>
    %15 = tpu.matmul %12, %14, %cst_15 {dimension_numbers = #tpu.dot_dimension_numbers<[1], [0], [0], [1], [0, 0, 1, 1], [], []>} : vector<8x32xf32>, vector<32x32xf32>, vector<8x32xf32> -> vector<8x32xf32>
    %c1 = arith.constant 1 : index
    %c0_16 = arith.constant 0 : index
    %16 = vector.load %arg4[%c1, %c0_16] : memref<21x128xf32, #tpu.memory_space<vmem>>, vector<1x32xf32>
    %17 = vector.broadcast %16 : vector<1x32xf32> to vector<8x32xf32>
    %18 = arith.addf %15, %17 : vector<8x32xf32>
    %19 = arith.addf %12, %18 : vector<8x32xf32>
    %c2 = arith.constant 2 : index
    %c0_17 = arith.constant 0 : index
    %20 = vector.load %arg4[%c2, %c0_17] : memref<21x128xf32, #tpu.memory_space<vmem>>, vector<1x32xf32>
    %c3 = arith.constant 3 : index
    %c0_18 = arith.constant 0 : index
    %21 = vector.load %arg4[%c3, %c0_18] : memref<21x128xf32, #tpu.memory_space<vmem>>, vector<1x32xf32>
    %cst_19 = arith.constant dense<0.000000e+00> : vector<8xf32>
    %22 = vector.multi_reduction <add>, %19, %cst_19 [1] : vector<8x32xf32> to vector<8xf32>
    %23 = vector.shape_cast %22 : vector<8xf32> to vector<8x1xf32>
    %cst_20 = arith.constant 3.200000e+01 : f32
    %24 = vector.broadcast %cst_20 : f32 to vector<8x1xf32>
    %25 = arith.divf %23, %24 : vector<8x1xf32>
    %26 = vector.broadcast %25 : vector<8x1xf32> to vector<8x32xf32>
    %27 = arith.subf %19, %26 : vector<8x32xf32>
    %28 = arith.mulf %27, %27 : vector<8x32xf32>
    %cst_21 = arith.constant dense<0.000000e+00> : vector<8xf32>
    %29 = vector.multi_reduction <add>, %28, %cst_21 [1] : vector<8x32xf32> to vector<8xf32>
    %30 = vector.shape_cast %29 : vector<8xf32> to vector<8x1xf32>
    %cst_22 = arith.constant 3.200000e+01 : f32
    %31 = vector.broadcast %cst_22 : f32 to vector<8x1xf32>
    %32 = arith.divf %30, %31 : vector<8x1xf32>
    %33 = vector.broadcast %25 : vector<8x1xf32> to vector<8x32xf32>
    %34 = arith.subf %19, %33 : vector<8x32xf32>
    %cst_23 = arith.constant 9.99999974E-6 : f32
    %35 = vector.broadcast %cst_23 : f32 to vector<8x1xf32>
    %36 = arith.addf %32, %35 : vector<8x1xf32>
    %37 = math.rsqrt %36 : vector<8x1xf32>
    %38 = vector.broadcast %37 : vector<8x1xf32> to vector<8x32xf32>
    %39 = arith.mulf %34, %38 : vector<8x32xf32>
    %40 = vector.broadcast %20 : vector<1x32xf32> to vector<8x32xf32>
    %41 = arith.mulf %39, %40 : vector<8x32xf32>
    %42 = vector.broadcast %21 : vector<1x32xf32> to vector<8x32xf32>
    %43 = arith.addf %41, %42 : vector<8x32xf32>
    %c0_24 = arith.constant 0 : index
    %c0_25 = arith.constant 0 : index
    %c0_26 = arith.constant 0 : index
    %44 = vector.load %arg7[%c0_24, %c0_25, %c0_26] : memref<2x32x64xf32, #tpu.memory_space<vmem>>, vector<1x32x64xf32>
    %45 = vector.shape_cast %44 : vector<1x32x64xf32> to vector<32x64xf32>
    %cst_27 = arith.constant dense<0.000000e+00> : vector<8x64xf32>
    %46 = tpu.matmul %43, %45, %cst_27 {dimension_numbers = #tpu.dot_dimension_numbers<[1], [0], [0], [1], [0, 0, 1, 1], [], []>} : vector<8x32xf32>, vector<32x64xf32>, vector<8x64xf32> -> vector<8x64xf32>
    %c4 = arith.constant 4 : index
    %c0_28 = arith.constant 0 : index
    %47 = vector.load %arg4[%c4, %c0_28] : memref<21x128xf32, #tpu.memory_space<vmem>>, vector<1x64xf32>
    %48 = vector.broadcast %47 : vector<1x64xf32> to vector<8x64xf32>
    %49 = arith.addf %46, %48 : vector<8x64xf32>
    %cst_29 = arith.constant 0.000000e+00 : f32
    %50 = vector.broadcast %cst_29 : f32 to vector<8x64xf32>
    %51 = arith.maximumf %49, %50 : vector<8x64xf32>
    %c0_30 = arith.constant 0 : index
    %c0_31 = arith.constant 0 : index
    %c0_32 = arith.constant 0 : index
    %52 = vector.load %arg8[%c0_30, %c0_31, %c0_32] : memref<2x64x32xf32, #tpu.memory_space<vmem>>, vector<1x64x32xf32>
    %53 = vector.shape_cast %52 : vector<1x64x32xf32> to vector<64x32xf32>
    %cst_33 = arith.constant dense<0.000000e+00> : vector<8x32xf32>
    %54 = tpu.matmul %51, %53, %cst_33 {dimension_numbers = #tpu.dot_dimension_numbers<[1], [0], [0], [1], [0, 0, 1, 1], [], []>} : vector<8x64xf32>, vector<64x32xf32>, vector<8x32xf32> -> vector<8x32xf32>
    %c5 = arith.constant 5 : index
    %c0_34 = arith.constant 0 : index
    %55 = vector.load %arg4[%c5, %c0_34] : memref<21x128xf32, #tpu.memory_space<vmem>>, vector<1x32xf32>
    %56 = vector.broadcast %55 : vector<1x32xf32> to vector<8x32xf32>
    %57 = arith.addf %54, %56 : vector<8x32xf32>
    %58 = arith.addf %43, %57 : vector<8x32xf32>
    %c6 = arith.constant 6 : index
    %c0_35 = arith.constant 0 : index
    %59 = vector.load %arg4[%c6, %c0_35] : memref<21x128xf32, #tpu.memory_space<vmem>>, vector<1x32xf32>
    %c7 = arith.constant 7 : index
    %c0_36 = arith.constant 0 : index
    %60 = vector.load %arg4[%c7, %c0_36] : memref<21x128xf32, #tpu.memory_space<vmem>>, vector<1x32xf32>
    %cst_37 = arith.constant dense<0.000000e+00> : vector<8xf32>
    %61 = vector.multi_reduction <add>, %58, %cst_37 [1] : vector<8x32xf32> to vector<8xf32>
    %62 = vector.shape_cast %61 : vector<8xf32> to vector<8x1xf32>
    %cst_38 = arith.constant 3.200000e+01 : f32
    %63 = vector.broadcast %cst_38 : f32 to vector<8x1xf32>
    %64 = arith.divf %62, %63 : vector<8x1xf32>
    %65 = vector.broadcast %64 : vector<8x1xf32> to vector<8x32xf32>
    %66 = arith.subf %58, %65 : vector<8x32xf32>
    %67 = arith.mulf %66, %66 : vector<8x32xf32>
    %cst_39 = arith.constant dense<0.000000e+00> : vector<8xf32>
    %68 = vector.multi_reduction <add>, %67, %cst_39 [1] : vector<8x32xf32> to vector<8xf32>
    %69 = vector.shape_cast %68 : vector<8xf32> to vector<8x1xf32>
    %cst_40 = arith.constant 3.200000e+01 : f32
    %70 = vector.broadcast %cst_40 : f32 to vector<8x1xf32>
    %71 = arith.divf %69, %70 : vector<8x1xf32>
    %72 = vector.broadcast %64 : vector<8x1xf32> to vector<8x32xf32>
    %73 = arith.subf %58, %72 : vector<8x32xf32>
    %cst_41 = arith.constant 9.99999974E-6 : f32
    %74 = vector.broadcast %cst_41 : f32 to vector<8x1xf32>
    %75 = arith.addf %71, %74 : vector<8x1xf32>
    %76 = math.rsqrt %75 : vector<8x1xf32>
    %77 = vector.broadcast %76 : vector<8x1xf32> to vector<8x32xf32>
    %78 = arith.mulf %73, %77 : vector<8x32xf32>
    %79 = vector.broadcast %59 : vector<1x32xf32> to vector<8x32xf32>
    %80 = arith.mulf %78, %79 : vector<8x32xf32>
    %81 = vector.broadcast %60 : vector<1x32xf32> to vector<8x32xf32>
    %82 = arith.addf %80, %81 : vector<8x32xf32>
    %c1_42 = arith.constant 1 : index
    %c0_43 = arith.constant 0 : index
    %c0_44 = arith.constant 0 : index
    %83 = vector.load %arg6[%c1_42, %c0_43, %c0_44] : memref<2x32x32xf32, #tpu.memory_space<vmem>>, vector<1x32x32xf32>
    %84 = vector.shape_cast %83 : vector<1x32x32xf32> to vector<32x32xf32>
    %cst_45 = arith.constant dense<0.000000e+00> : vector<8x32xf32>
    %85 = tpu.matmul %82, %84, %cst_45 {dimension_numbers = #tpu.dot_dimension_numbers<[1], [0], [0], [1], [0, 0, 1, 1], [], []>} : vector<8x32xf32>, vector<32x32xf32>, vector<8x32xf32> -> vector<8x32xf32>
    %c8_46 = arith.constant 8 : index
    %c0_47 = arith.constant 0 : index
    %86 = vector.load %arg4[%c8_46, %c0_47] : memref<21x128xf32, #tpu.memory_space<vmem>>, vector<1x32xf32>
    %87 = vector.broadcast %86 : vector<1x32xf32> to vector<8x32xf32>
    %88 = arith.addf %85, %87 : vector<8x32xf32>
    %89 = arith.addf %82, %88 : vector<8x32xf32>
    %c9 = arith.constant 9 : index
    %c0_48 = arith.constant 0 : index
    %90 = vector.load %arg4[%c9, %c0_48] : memref<21x128xf32, #tpu.memory_space<vmem>>, vector<1x32xf32>
    %c10 = arith.constant 10 : index
    %c0_49 = arith.constant 0 : index
    %91 = vector.load %arg4[%c10, %c0_49] : memref<21x128xf32, #tpu.memory_space<vmem>>, vector<1x32xf32>
    %cst_50 = arith.constant dense<0.000000e+00> : vector<8xf32>
    %92 = vector.multi_reduction <add>, %89, %cst_50 [1] : vector<8x32xf32> to vector<8xf32>
    %93 = vector.shape_cast %92 : vector<8xf32> to vector<8x1xf32>
    %cst_51 = arith.constant 3.200000e+01 : f32
    %94 = vector.broadcast %cst_51 : f32 to vector<8x1xf32>
    %95 = arith.divf %93, %94 : vector<8x1xf32>
    %96 = vector.broadcast %95 : vector<8x1xf32> to vector<8x32xf32>
    %97 = arith.subf %89, %96 : vector<8x32xf32>
    %98 = arith.mulf %97, %97 : vector<8x32xf32>
    %cst_52 = arith.constant dense<0.000000e+00> : vector<8xf32>
    %99 = vector.multi_reduction <add>, %98, %cst_52 [1] : vector<8x32xf32> to vector<8xf32>
    %100 = vector.shape_cast %99 : vector<8xf32> to vector<8x1xf32>
    %cst_53 = arith.constant 3.200000e+01 : f32
    %101 = vector.broadcast %cst_53 : f32 to vector<8x1xf32>
    %102 = arith.divf %100, %101 : vector<8x1xf32>
    %103 = vector.broadcast %95 : vector<8x1xf32> to vector<8x32xf32>
    %104 = arith.subf %89, %103 : vector<8x32xf32>
    %cst_54 = arith.constant 9.99999974E-6 : f32
    %105 = vector.broadcast %cst_54 : f32 to vector<8x1xf32>
    %106 = arith.addf %102, %105 : vector<8x1xf32>
    %107 = math.rsqrt %106 : vector<8x1xf32>
    %108 = vector.broadcast %107 : vector<8x1xf32> to vector<8x32xf32>
    %109 = arith.mulf %104, %108 : vector<8x32xf32>
    %110 = vector.broadcast %90 : vector<1x32xf32> to vector<8x32xf32>
    %111 = arith.mulf %109, %110 : vector<8x32xf32>
    %112 = vector.broadcast %91 : vector<1x32xf32> to vector<8x32xf32>
    %113 = arith.addf %111, %112 : vector<8x32xf32>
    %c1_55 = arith.constant 1 : index
    %c0_56 = arith.constant 0 : index
    %c0_57 = arith.constant 0 : index
    %114 = vector.load %arg7[%c1_55, %c0_56, %c0_57] : memref<2x32x64xf32, #tpu.memory_space<vmem>>, vector<1x32x64xf32>
    %115 = vector.shape_cast %114 : vector<1x32x64xf32> to vector<32x64xf32>
    %cst_58 = arith.constant dense<0.000000e+00> : vector<8x64xf32>
    %116 = tpu.matmul %113, %115, %cst_58 {dimension_numbers = #tpu.dot_dimension_numbers<[1], [0], [0], [1], [0, 0, 1, 1], [], []>} : vector<8x32xf32>, vector<32x64xf32>, vector<8x64xf32> -> vector<8x64xf32>
    %c11 = arith.constant 11 : index
    %c0_59 = arith.constant 0 : index
    %117 = vector.load %arg4[%c11, %c0_59] : memref<21x128xf32, #tpu.memory_space<vmem>>, vector<1x64xf32>
    %118 = vector.broadcast %117 : vector<1x64xf32> to vector<8x64xf32>
    %119 = arith.addf %116, %118 : vector<8x64xf32>
    %cst_60 = arith.constant 0.000000e+00 : f32
    %120 = vector.broadcast %cst_60 : f32 to vector<8x64xf32>
    %121 = arith.maximumf %119, %120 : vector<8x64xf32>
    %c1_61 = arith.constant 1 : index
    %c0_62 = arith.constant 0 : index
    %c0_63 = arith.constant 0 : index
    %122 = vector.load %arg8[%c1_61, %c0_62, %c0_63] : memref<2x64x32xf32, #tpu.memory_space<vmem>>, vector<1x64x32xf32>
    %123 = vector.shape_cast %122 : vector<1x64x32xf32> to vector<64x32xf32>
    %cst_64 = arith.constant dense<0.000000e+00> : vector<8x32xf32>
    %124 = tpu.matmul %121, %123, %cst_64 {dimension_numbers = #tpu.dot_dimension_numbers<[1], [0], [0], [1], [0, 0, 1, 1], [], []>} : vector<8x64xf32>, vector<64x32xf32>, vector<8x32xf32> -> vector<8x32xf32>
    %c12 = arith.constant 12 : index
    %c0_65 = arith.constant 0 : index
    %125 = vector.load %arg4[%c12, %c0_65] : memref<21x128xf32, #tpu.memory_space<vmem>>, vector<1x32xf32>
    %126 = vector.broadcast %125 : vector<1x32xf32> to vector<8x32xf32>
    %127 = arith.addf %124, %126 : vector<8x32xf32>
    %128 = arith.addf %113, %127 : vector<8x32xf32>
    %c13 = arith.constant 13 : index
    %c0_66 = arith.constant 0 : index
    %129 = vector.load %arg4[%c13, %c0_66] : memref<21x128xf32, #tpu.memory_space<vmem>>, vector<1x32xf32>
    %c14 = arith.constant 14 : index
    %c0_67 = arith.constant 0 : index
    %130 = vector.load %arg4[%c14, %c0_67] : memref<21x128xf32, #tpu.memory_space<vmem>>, vector<1x32xf32>
    %cst_68 = arith.constant dense<0.000000e+00> : vector<8xf32>
    %131 = vector.multi_reduction <add>, %128, %cst_68 [1] : vector<8x32xf32> to vector<8xf32>
    %132 = vector.shape_cast %131 : vector<8xf32> to vector<8x1xf32>
    %cst_69 = arith.constant 3.200000e+01 : f32
    %133 = vector.broadcast %cst_69 : f32 to vector<8x1xf32>
    %134 = arith.divf %132, %133 : vector<8x1xf32>
    %135 = vector.broadcast %134 : vector<8x1xf32> to vector<8x32xf32>
    %136 = arith.subf %128, %135 : vector<8x32xf32>
    %137 = arith.mulf %136, %136 : vector<8x32xf32>
    %cst_70 = arith.constant dense<0.000000e+00> : vector<8xf32>
    %138 = vector.multi_reduction <add>, %137, %cst_70 [1] : vector<8x32xf32> to vector<8xf32>
    %139 = vector.shape_cast %138 : vector<8xf32> to vector<8x1xf32>
    %cst_71 = arith.constant 3.200000e+01 : f32
    %140 = vector.broadcast %cst_71 : f32 to vector<8x1xf32>
    %141 = arith.divf %139, %140 : vector<8x1xf32>
    %142 = vector.broadcast %134 : vector<8x1xf32> to vector<8x32xf32>
    %143 = arith.subf %128, %142 : vector<8x32xf32>
    %cst_72 = arith.constant 9.99999974E-6 : f32
    %144 = vector.broadcast %cst_72 : f32 to vector<8x1xf32>
    %145 = arith.addf %141, %144 : vector<8x1xf32>
    %146 = math.rsqrt %145 : vector<8x1xf32>
    %147 = vector.broadcast %146 : vector<8x1xf32> to vector<8x32xf32>
    %148 = arith.mulf %143, %147 : vector<8x32xf32>
    %149 = vector.broadcast %129 : vector<1x32xf32> to vector<8x32xf32>
    %150 = arith.mulf %148, %149 : vector<8x32xf32>
    %151 = vector.broadcast %130 : vector<1x32xf32> to vector<8x32xf32>
    %152 = arith.addf %150, %151 : vector<8x32xf32>
    %c0_73 = arith.constant 0 : index
    %c0_74 = arith.constant 0 : index
    %c0_75 = arith.constant 0 : index
    %153 = vector.load %arg9[%c0_73, %c0_74, %c0_75] : memref<3x32x64xf32, #tpu.memory_space<vmem>>, vector<1x32x64xf32>
    %154 = vector.shape_cast %153 : vector<1x32x64xf32> to vector<32x64xf32>
    %cst_76 = arith.constant dense<0.000000e+00> : vector<8x64xf32>
    %155 = tpu.matmul %152, %154, %cst_76 {dimension_numbers = #tpu.dot_dimension_numbers<[1], [0], [0], [1], [0, 0, 1, 1], [], []>} : vector<8x32xf32>, vector<32x64xf32>, vector<8x64xf32> -> vector<8x64xf32>
    %c0_77 = arith.constant 0 : index
    %c0_78 = arith.constant 0 : index
    %c0_79 = arith.constant 0 : index
    %156 = vector.load %arg10[%c0_77, %c0_78, %c0_79] : memref<3x64x64xf32, #tpu.memory_space<vmem>>, vector<1x64x64xf32>
    %157 = vector.shape_cast %156 : vector<1x64x64xf32> to vector<64x64xf32>
    %cst_80 = arith.constant dense<0.000000e+00> : vector<8x64xf32>
    %158 = tpu.matmul %2, %157, %cst_80 {dimension_numbers = #tpu.dot_dimension_numbers<[1], [0], [0], [1], [0, 0, 1, 1], [], []>} : vector<8x64xf32>, vector<64x64xf32>, vector<8x64xf32> -> vector<8x64xf32>
    %159 = arith.addf %155, %158 : vector<8x64xf32>
    %c15 = arith.constant 15 : index
    %c0_81 = arith.constant 0 : index
    %160 = vector.load %arg4[%c15, %c0_81] : memref<21x128xf32, #tpu.memory_space<vmem>>, vector<1x64xf32>
    %161 = vector.broadcast %160 : vector<1x64xf32> to vector<8x64xf32>
    %162 = arith.addf %159, %161 : vector<8x64xf32>
    %163 = arith.negf %162 : vector<8x64xf32>
    %164 = math.exp %163 : vector<8x64xf32>
    %cst_82 = arith.constant 1.000000e+00 : f32
    %165 = vector.broadcast %cst_82 : f32 to vector<8x64xf32>
    %166 = arith.addf %165, %164 : vector<8x64xf32>
    %167 = arith.divf %165, %166 : vector<8x64xf32>
    %c1_83 = arith.constant 1 : index
    %c0_84 = arith.constant 0 : index
    %c0_85 = arith.constant 0 : index
    %168 = vector.load %arg9[%c1_83, %c0_84, %c0_85] : memref<3x32x64xf32, #tpu.memory_space<vmem>>, vector<1x32x64xf32>
    %169 = vector.shape_cast %168 : vector<1x32x64xf32> to vector<32x64xf32>
    %cst_86 = arith.constant dense<0.000000e+00> : vector<8x64xf32>
    %170 = tpu.matmul %152, %169, %cst_86 {dimension_numbers = #tpu.dot_dimension_numbers<[1], [0], [0], [1], [0, 0, 1, 1], [], []>} : vector<8x32xf32>, vector<32x64xf32>, vector<8x64xf32> -> vector<8x64xf32>
    %c1_87 = arith.constant 1 : index
    %c0_88 = arith.constant 0 : index
    %c0_89 = arith.constant 0 : index
    %171 = vector.load %arg10[%c1_87, %c0_88, %c0_89] : memref<3x64x64xf32, #tpu.memory_space<vmem>>, vector<1x64x64xf32>
    %172 = vector.shape_cast %171 : vector<1x64x64xf32> to vector<64x64xf32>
    %cst_90 = arith.constant dense<0.000000e+00> : vector<8x64xf32>
    %173 = tpu.matmul %2, %172, %cst_90 {dimension_numbers = #tpu.dot_dimension_numbers<[1], [0], [0], [1], [0, 0, 1, 1], [], []>} : vector<8x64xf32>, vector<64x64xf32>, vector<8x64xf32> -> vector<8x64xf32>
    %174 = arith.addf %170, %173 : vector<8x64xf32>
    %c16 = arith.constant 16 : index
    %c0_91 = arith.constant 0 : index
    %175 = vector.load %arg4[%c16, %c0_91] : memref<21x128xf32, #tpu.memory_space<vmem>>, vector<1x64xf32>
    %176 = vector.broadcast %175 : vector<1x64xf32> to vector<8x64xf32>
    %177 = arith.addf %174, %176 : vector<8x64xf32>
    %178 = arith.negf %177 : vector<8x64xf32>
    %179 = math.exp %178 : vector<8x64xf32>
    %cst_92 = arith.constant 1.000000e+00 : f32
    %180 = vector.broadcast %cst_92 : f32 to vector<8x64xf32>
    %181 = arith.addf %180, %179 : vector<8x64xf32>
    %182 = arith.divf %180, %181 : vector<8x64xf32>
    %c2_93 = arith.constant 2 : index
    %c0_94 = arith.constant 0 : index
    %c0_95 = arith.constant 0 : index
    %183 = vector.load %arg9[%c2_93, %c0_94, %c0_95] : memref<3x32x64xf32, #tpu.memory_space<vmem>>, vector<1x32x64xf32>
    %184 = vector.shape_cast %183 : vector<1x32x64xf32> to vector<32x64xf32>
    %cst_96 = arith.constant dense<0.000000e+00> : vector<8x64xf32>
    %185 = tpu.matmul %152, %184, %cst_96 {dimension_numbers = #tpu.dot_dimension_numbers<[1], [0], [0], [1], [0, 0, 1, 1], [], []>} : vector<8x32xf32>, vector<32x64xf32>, vector<8x64xf32> -> vector<8x64xf32>
    %c17 = arith.constant 17 : index
    %c0_97 = arith.constant 0 : index
    %186 = vector.load %arg4[%c17, %c0_97] : memref<21x128xf32, #tpu.memory_space<vmem>>, vector<1x64xf32>
    %187 = vector.broadcast %186 : vector<1x64xf32> to vector<8x64xf32>
    %188 = arith.addf %185, %187 : vector<8x64xf32>
    %c2_98 = arith.constant 2 : index
    %c0_99 = arith.constant 0 : index
    %c0_100 = arith.constant 0 : index
    %189 = vector.load %arg10[%c2_98, %c0_99, %c0_100] : memref<3x64x64xf32, #tpu.memory_space<vmem>>, vector<1x64x64xf32>
    %190 = vector.shape_cast %189 : vector<1x64x64xf32> to vector<64x64xf32>
    %cst_101 = arith.constant dense<0.000000e+00> : vector<8x64xf32>
    %191 = tpu.matmul %2, %190, %cst_101 {dimension_numbers = #tpu.dot_dimension_numbers<[1], [0], [0], [1], [0, 0, 1, 1], [], []>} : vector<8x64xf32>, vector<64x64xf32>, vector<8x64xf32> -> vector<8x64xf32>
    %c18 = arith.constant 18 : index
    %c0_102 = arith.constant 0 : index
    %192 = vector.load %arg4[%c18, %c0_102] : memref<21x128xf32, #tpu.memory_space<vmem>>, vector<1x64xf32>
    %193 = vector.broadcast %192 : vector<1x64xf32> to vector<8x64xf32>
    %194 = arith.addf %191, %193 : vector<8x64xf32>
    %195 = arith.mulf %167, %194 : vector<8x64xf32>
    %196 = arith.addf %188, %195 : vector<8x64xf32>
    %197 = math.tanh %196 : vector<8x64xf32>
    %cst_103 = arith.constant 1.000000e+00 : f32
    %198 = vector.broadcast %cst_103 : f32 to vector<8x64xf32>
    %199 = arith.subf %198, %182 : vector<8x64xf32>
    %200 = arith.mulf %199, %197 : vector<8x64xf32>
    %201 = arith.mulf %182, %2 : vector<8x64xf32>
    %202 = arith.addf %200, %201 : vector<8x64xf32>
    %c0_104 = arith.constant 0 : index
    %c0_105 = arith.constant 0 : index
    %203 = vector.load %arg11[%c0_104, %c0_105] : memref<64x32xf32, #tpu.memory_space<vmem>>, vector<64x32xf32>
    %cst_106 = arith.constant dense<0.000000e+00> : vector<8x32xf32>
    %204 = tpu.matmul %202, %203, %cst_106 {dimension_numbers = #tpu.dot_dimension_numbers<[1], [0], [0], [1], [0, 0, 1, 1], [], []>} : vector<8x64xf32>, vector<64x32xf32>, vector<8x32xf32> -> vector<8x32xf32>
    %c19 = arith.constant 19 : index
    %c0_107 = arith.constant 0 : index
    %205 = vector.load %arg4[%c19, %c0_107] : memref<21x128xf32, #tpu.memory_space<vmem>>, vector<1x32xf32>
    %206 = vector.broadcast %205 : vector<1x32xf32> to vector<8x32xf32>
    %207 = arith.addf %204, %206 : vector<8x32xf32>
    %cst_108 = arith.constant 0.000000e+00 : f32
    %208 = vector.broadcast %cst_108 : f32 to vector<8x32xf32>
    %209 = arith.maximumf %207, %208 : vector<8x32xf32>
    %c0_109 = arith.constant 0 : index
    %c0_110 = arith.constant 0 : index
    %210 = vector.load %arg12[%c0_109, %c0_110] : memref<32x32xf32, #tpu.memory_space<vmem>>, vector<32x32xf32>
    %cst_111 = arith.constant dense<0.000000e+00> : vector<8x32xf32>
    %211 = tpu.matmul %209, %210, %cst_111 {dimension_numbers = #tpu.dot_dimension_numbers<[1], [0], [0], [1], [0, 0, 1, 1], [], []>} : vector<8x32xf32>, vector<32x32xf32>, vector<8x32xf32> -> vector<8x32xf32>
    %c20 = arith.constant 20 : index
    %c0_112 = arith.constant 0 : index
    %212 = vector.load %arg4[%c20, %c0_112] : memref<21x128xf32, #tpu.memory_space<vmem>>, vector<1x32xf32>
    %213 = vector.broadcast %212 : vector<1x32xf32> to vector<8x32xf32>
    %214 = arith.addf %211, %213 : vector<8x32xf32>
    %215 = vector.extract_strided_slice %214 {offsets = [0, 0], sizes = [8, 8], strides = [1, 1]} : vector<8x32xf32> to vector<8x8xf32>
    %cst_113 = arith.constant dense<0xFF800000> : vector<8xf32>
    %216 = vector.multi_reduction <maximumf>, %215, %cst_113 [1] : vector<8x8xf32> to vector<8xf32>
    %217 = vector.shape_cast %216 : vector<8xf32> to vector<8x1xf32>
    %218 = tpu.iota {dimensions = array<i32: 1>} : vector<8x8xi32>
    %219 = vector.broadcast %217 : vector<8x1xf32> to vector<8x8xf32>
    %220 = arith.cmpf oeq, %215, %219 : vector<8x8xf32>
    %c8_i32 = arith.constant 8 : i32
    %221 = vector.broadcast %c8_i32 : i32 to vector<8x8xi32>
    %222 = arith.select %220, %218, %221 : vector<8x8xi1>, vector<8x8xi32>
    %cst_114 = arith.constant dense<2147483647> : vector<8xi32>
    %223 = vector.multi_reduction <minsi>, %222, %cst_114 [1] : vector<8x8xi32> to vector<8xi32>
    %224 = vector.shape_cast %223 : vector<8xi32> to vector<8x1xi32>
    %225 = vector.broadcast %224 : vector<8x1xi32> to vector<8x8xi32>
    %226 = arith.cmpi eq, %218, %225 : vector<8x8xi32>
    %227 = arith.extui %226 : vector<8x8xi1> to vector<8x8xi32>
    %228 = arith.sitofp %227 : vector<8x8xi32> to vector<8x8xf32>
    %229 = vector.extract_strided_slice %214 {offsets = [0, 8], sizes = [8, 8], strides = [1, 1]} : vector<8x32xf32> to vector<8x8xf32>
    %cst_115 = arith.constant dense<0xFF800000> : vector<8xf32>
    %230 = vector.multi_reduction <maximumf>, %229, %cst_115 [1] : vector<8x8xf32> to vector<8xf32>
    %231 = vector.shape_cast %230 : vector<8xf32> to vector<8x1xf32>
    %232 = tpu.iota {dimensions = array<i32: 1>} : vector<8x8xi32>
    %233 = vector.broadcast %231 : vector<8x1xf32> to vector<8x8xf32>
    %234 = arith.cmpf oeq, %229, %233 : vector<8x8xf32>
    %c8_i32_116 = arith.constant 8 : i32
    %235 = vector.broadcast %c8_i32_116 : i32 to vector<8x8xi32>
    %236 = arith.select %234, %232, %235 : vector<8x8xi1>, vector<8x8xi32>
    %cst_117 = arith.constant dense<2147483647> : vector<8xi32>
    %237 = vector.multi_reduction <minsi>, %236, %cst_117 [1] : vector<8x8xi32> to vector<8xi32>
    %238 = vector.shape_cast %237 : vector<8xi32> to vector<8x1xi32>
    %239 = vector.broadcast %238 : vector<8x1xi32> to vector<8x8xi32>
    %240 = arith.cmpi eq, %232, %239 : vector<8x8xi32>
    %241 = arith.extui %240 : vector<8x8xi1> to vector<8x8xi32>
    %242 = arith.sitofp %241 : vector<8x8xi32> to vector<8x8xf32>
    %243 = vector.extract_strided_slice %214 {offsets = [0, 16], sizes = [8, 8], strides = [1, 1]} : vector<8x32xf32> to vector<8x8xf32>
    %cst_118 = arith.constant dense<0xFF800000> : vector<8xf32>
    %244 = vector.multi_reduction <maximumf>, %243, %cst_118 [1] : vector<8x8xf32> to vector<8xf32>
    %245 = vector.shape_cast %244 : vector<8xf32> to vector<8x1xf32>
    %246 = tpu.iota {dimensions = array<i32: 1>} : vector<8x8xi32>
    %247 = vector.broadcast %245 : vector<8x1xf32> to vector<8x8xf32>
    %248 = arith.cmpf oeq, %243, %247 : vector<8x8xf32>
    %c8_i32_119 = arith.constant 8 : i32
    %249 = vector.broadcast %c8_i32_119 : i32 to vector<8x8xi32>
    %250 = arith.select %248, %246, %249 : vector<8x8xi1>, vector<8x8xi32>
    %cst_120 = arith.constant dense<2147483647> : vector<8xi32>
    %251 = vector.multi_reduction <minsi>, %250, %cst_120 [1] : vector<8x8xi32> to vector<8xi32>
    %252 = vector.shape_cast %251 : vector<8xi32> to vector<8x1xi32>
    %253 = vector.broadcast %252 : vector<8x1xi32> to vector<8x8xi32>
    %254 = arith.cmpi eq, %246, %253 : vector<8x8xi32>
    %255 = arith.extui %254 : vector<8x8xi1> to vector<8x8xi32>
    %256 = arith.sitofp %255 : vector<8x8xi32> to vector<8x8xf32>
    %257 = vector.extract_strided_slice %214 {offsets = [0, 24], sizes = [8, 8], strides = [1, 1]} : vector<8x32xf32> to vector<8x8xf32>
    %cst_121 = arith.constant dense<0xFF800000> : vector<8xf32>
    %258 = vector.multi_reduction <maximumf>, %257, %cst_121 [1] : vector<8x8xf32> to vector<8xf32>
    %259 = vector.shape_cast %258 : vector<8xf32> to vector<8x1xf32>
    %260 = tpu.iota {dimensions = array<i32: 1>} : vector<8x8xi32>
    %261 = vector.broadcast %259 : vector<8x1xf32> to vector<8x8xf32>
    %262 = arith.cmpf oeq, %257, %261 : vector<8x8xf32>
    %c8_i32_122 = arith.constant 8 : i32
    %263 = vector.broadcast %c8_i32_122 : i32 to vector<8x8xi32>
    %264 = arith.select %262, %260, %263 : vector<8x8xi1>, vector<8x8xi32>
    %cst_123 = arith.constant dense<2147483647> : vector<8xi32>
    %265 = vector.multi_reduction <minsi>, %264, %cst_123 [1] : vector<8x8xi32> to vector<8xi32>
    %266 = vector.shape_cast %265 : vector<8xi32> to vector<8x1xi32>
    %267 = vector.broadcast %266 : vector<8x1xi32> to vector<8x8xi32>
    %268 = arith.cmpi eq, %260, %267 : vector<8x8xi32>
    %269 = arith.extui %268 : vector<8x8xi1> to vector<8x8xi32>
    %270 = arith.sitofp %269 : vector<8x8xi32> to vector<8x8xf32>
    %271 = tpu.concatenate %214, %228, %242, %256, %270, %202 in 1 : vector<8x32xf32>, vector<8x8xf32>, vector<8x8xf32>, vector<8x8xf32>, vector<8x8xf32>, vector<8x64xf32> -> vector<8x128xf32>
    %c0_124 = arith.constant 0 : index
    %c0_125 = arith.constant 0 : index
    %272 = vector.load %arg13[%c0_124, %c0_125] : memref<8x128xf32, #tpu.memory_space<vmem>>, vector<8x128xf32>
    tpu.vector_store %arg13[%c0_124, %c0_125], %271 {strides = array<i32>} : memref<8x128xf32, #tpu.memory_space<vmem>>, vector<8x128xf32>,
    return
  }
  func.func @transform_0(%arg0: i32) -> (i32, i32) {
    %c0_i32 = arith.constant 0 : i32
    %c0_i32_0 = arith.constant 0 : i32
    return %arg0, %c0_i32 : i32, i32
  }
  func.func @transform_1(%arg0: i32) -> (i32, i32) {
    %c0_i32 = arith.constant 0 : i32
    %c0_i32_0 = arith.constant 0 : i32
    return %arg0, %c0_i32 : i32, i32
  }
  func.func @transform_2(%arg0: i32) -> (i32, i32) {
    %c0_i32 = arith.constant 0 : i32
    %c0_i32_0 = arith.constant 0 : i32
    return %arg0, %c0_i32 : i32, i32
  }
  func.func @transform_3(%arg0: i32) -> (i32, i32) {
    %c0_i32 = arith.constant 0 : i32
    %c0_i32_0 = arith.constant 0 : i32
    %c0_i32_1 = arith.constant 0 : i32
    return %c0_i32, %c0_i32_0 : i32, i32
  }
  func.func @transform_4(%arg0: i32) -> (i32, i32) {
    %c0_i32 = arith.constant 0 : i32
    %c0_i32_0 = arith.constant 0 : i32
    %c0_i32_1 = arith.constant 0 : i32
    return %c0_i32, %c0_i32_0 : i32, i32
  }
  func.func @transform_5(%arg0: i32) -> (i32, i32, i32) {
    %c0_i32 = arith.constant 0 : i32
    %c0_i32_0 = arith.constant 0 : i32
    %c0_i32_1 = arith.constant 0 : i32
    %c0_i32_2 = arith.constant 0 : i32
    return %c0_i32, %c0_i32_0, %c0_i32_1 : i32, i32, i32
  }
  func.func @transform_6(%arg0: i32) -> (i32, i32, i32) {
    %c0_i32 = arith.constant 0 : i32
    %c0_i32_0 = arith.constant 0 : i32
    %c0_i32_1 = arith.constant 0 : i32
    %c0_i32_2 = arith.constant 0 : i32
    return %c0_i32, %c0_i32_0, %c0_i32_1 : i32, i32, i32
  }
  func.func @transform_7(%arg0: i32) -> (i32, i32, i32) {
    %c0_i32 = arith.constant 0 : i32
    %c0_i32_0 = arith.constant 0 : i32
    %c0_i32_1 = arith.constant 0 : i32
    %c0_i32_2 = arith.constant 0 : i32
    return %c0_i32, %c0_i32_0, %c0_i32_1 : i32, i32, i32
  }
  func.func @transform_8(%arg0: i32) -> (i32, i32, i32) {
    %c0_i32 = arith.constant 0 : i32
    %c0_i32_0 = arith.constant 0 : i32
    %c0_i32_1 = arith.constant 0 : i32
    %c0_i32_2 = arith.constant 0 : i32
    return %c0_i32, %c0_i32_0, %c0_i32_1 : i32, i32, i32
  }
  func.func @transform_9(%arg0: i32) -> (i32, i32, i32) {
    %c0_i32 = arith.constant 0 : i32
    %c0_i32_0 = arith.constant 0 : i32
    %c0_i32_1 = arith.constant 0 : i32
    %c0_i32_2 = arith.constant 0 : i32
    return %c0_i32, %c0_i32_0, %c0_i32_1 : i32, i32, i32
  }
  func.func @transform_10(%arg0: i32) -> (i32, i32) {
    %c0_i32 = arith.constant 0 : i32
    %c0_i32_0 = arith.constant 0 : i32
    %c0_i32_1 = arith.constant 0 : i32
    return %c0_i32, %c0_i32_0 : i32, i32
  }
  func.func @transform_11(%arg0: i32) -> (i32, i32) {
    %c0_i32 = arith.constant 0 : i32
    %c0_i32_0 = arith.constant 0 : i32
    %c0_i32_1 = arith.constant 0 : i32
    return %c0_i32, %c0_i32_0 : i32, i32
  }
  func.func @transform_12(%arg0: i32) -> (i32, i32) {
    %c0_i32 = arith.constant 0 : i32
    %c0_i32_0 = arith.constant 0 : i32
    return %arg0, %c0_i32 : i32, i32
  }
}

</mosaic_0001>

<llo_original>
// kernel: tpu_custom_call.1
$region0: #{tpu_custom_call.1}
  #allocation0 [shape = 'u32[]', space=smem, size = 0x4, offset = 0x4, fixed_abs, tag = 'smem constant byte address 0x4 - core index']
  #allocation1 [shape = 'u32[144,128]{1,0:T(1,128)}', space=vmem, size = 0x12000, scoped, tag = 'internal scratch']
  %s0 = inlined_call_operand.hbm [shape: f32[8,8], index: 0, kind: input, shape index: {}]
  %s1 = inlined_call_operand.hbm [shape: f32[8,32], index: 1, kind: input, shape index: {}]
  %s2 = inlined_call_operand.hbm [shape: f32[8,64], index: 2, kind: input, shape index: {}]
  %s3 = inlined_call_operand.vmem [shape: f32[21,128], index: 3, kind: input, shape index: {}]
  %s4 = inlined_call_operand.vmem [shape: f32[40,32], index: 4, kind: input, shape index: {}]
  %s5 = inlined_call_operand.vmem [shape: f32[2,32,32], index: 5, kind: input, shape index: {}]
  %s6 = inlined_call_operand.hbm [shape: f32[2,32,64], index: 6, kind: input, shape index: {}]
  %s7 = inlined_call_operand.vmem [shape: f32[2,64,32], index: 7, kind: input, shape index: {}]
  %s8 = inlined_call_operand.vmem [shape: f32[3,32,64], index: 8, kind: input, shape index: {}]
  %s9 = inlined_call_operand.vmem [shape: f32[3,64,64], index: 9, kind: input, shape index: {}]
  %s10 = inlined_call_operand.vmem [shape: f32[64,32], index: 10, kind: input, shape index: {}]
  %s11 = inlined_call_operand.hbm [shape: f32[32,32], index: 11, kind: input, shape index: {}]
  %s12 = inlined_call_operand.hbm [shape: f32[8,128], index: 12, kind: output, shape index: {}]
  %s13 = sld [smem:[#allocation0]]
  $region78: #{tpu_custom_call.1} parent=0
    _
  %s15 = ssub.s32 1, %s13
  %s16 = scalar_select 0, %s15, %s13
  $region1: #{tpu_custom_call.1} parent=0
    #allocation2 [shape = 'u8[4096]{0}', space=vmem, size = 0x1000, scoped, tag = 'input window, operand 0, single buffered']
    #allocation3 [shape = 's32[1]{0}', space=sflag, size = 0x4, scoped, tag = 'scoped memory for tpu_custom_call.1']
    #allocation4 [shape = 's32[1]{0}', space=sflag, size = 0x4, scoped, tag = 'scoped memory for tpu_custom_call.1']
    #allocation5 [shape = 'u8[4096]{0}', space=vmem, size = 0x1000, scoped, tag = 'input window, operand 1, single buffered']
    #allocation6 [shape = 's32[1]{0}', space=sflag, size = 0x4, scoped, tag = 'scoped memory for tpu_custom_call.1']
    #allocation7 [shape = 'u8[4096]{0}', space=vmem, size = 0x1000, scoped, tag = 'input window, operand 2, single buffered']
    #allocation8 [shape = 'u8[32768]{0}', space=vmem, size = 0x8000, scoped, tag = 'input window, operand 6, single buffered']
    #allocation9 [shape = 's32[1]{0}', space=sflag, size = 0x4, scoped, tag = 'scoped memory for tpu_custom_call.1']
    #allocation10 [shape = 'u8[16384]{0}', space=vmem, size = 0x4000, scoped, tag = 'input window, operand 11, single buffered']
    #allocation11 [shape = 'u8[4096]{0}', space=vmem, size = 0x1000, scoped, tag = 'output window, operand 0, single buffered']
    %17 = vsyncpa [#allocation3], 0
    %18 = vsyncpa [#allocation6], 0
    %19 = vsyncpa [#allocation9], 0
    %20 = vsyncpa [#allocation4], 0
    // Predicated region
    $region2: #{tpu_custom_call.1} parent=1 // pred_check
      _
    $region3: #{tpu_custom_call.1} parent=1 // pred_check_branch
      %22 = sbr.rel (0) target = $region5
    $region4: #{tpu_custom_call.1} parent=1 // pred_region
      %s24 = ssub.s32 128, 128
      %25 = vsyncadd [#allocation3], %s24
      %s27 = sshll.u32 [#allocation2], 4
      %s28 = int_to_ptr.vmem [resolvable:$true] %s27
      %30 = dma.hbm_to_vmem [thread:$0]  %s0, 128, %s28, [#allocation3]
    $region5: #{tpu_custom_call.1} parent=1 // pred_fallthru
      _
    // Predicated region
    $region6: #{tpu_custom_call.1} parent=1 // pred_check
      _
    $region7: #{tpu_custom_call.1} parent=1 // pred_check_branch
      %32 = sbr.rel (0) target = $region9
    $region8: #{tpu_custom_call.1} parent=1 // pred_region
      %s34 = ssub.s32 128, 128
      %35 = vsyncadd [#allocation6], %s34
      %s37 = sshll.u32 [#allocation5], 4
      %s38 = int_to_ptr.vmem [resolvable:$true] %s37
      %40 = dma.hbm_to_vmem [thread:$0]  %s1, 128, %s38, [#allocation6]
    $region9: #{tpu_custom_call.1} parent=1 // pred_fallthru
      _
    // Predicated region
    $region10: #{tpu_custom_call.1} parent=1 // pred_check
      _
    $region11: #{tpu_custom_call.1} parent=1 // pred_check_branch
      %42 = sbr.rel (0) target = $region13
    $region12: #{tpu_custom_call.1} parent=1 // pred_region
      %s44 = ssub.s32 128, 128
      %45 = vsyncadd [#allocation6], %s44
      %s47 = sshll.u32 [#allocation7], 4
      %s48 = int_to_ptr.vmem [resolvable:$true] %s47
      %50 = dma.hbm_to_vmem [thread:$0]  %s2, 128, %s48, [#allocation6]
    $region13: #{tpu_custom_call.1} parent=1 // pred_fallthru
      _
    // Predicated region
    $region14: #{tpu_custom_call.1} parent=1 // pred_check
      _
    $region15: #{tpu_custom_call.1} parent=1 // pred_check_branch
      %52 = sbr.rel (0) target = $region17
    $region16: #{tpu_custom_call.1} parent=1 // pred_region
      _
    $region17: #{tpu_custom_call.1} parent=1 // pred_fallthru
      _
    // Predicated region
    $region18: #{tpu_custom_call.1} parent=1 // pred_check
      _
    $region19: #{tpu_custom_call.1} parent=1 // pred_check_branch
      %54 = sbr.rel (0) target = $region21
    $region20: #{tpu_custom_call.1} parent=1 // pred_region
      _
    $region21: #{tpu_custom_call.1} parent=1 // pred_fallthru
      _
    // Predicated region
    $region22: #{tpu_custom_call.1} parent=1 // pred_check
      _
    $region23: #{tpu_custom_call.1} parent=1 // pred_check_branch
      %56 = sbr.rel (0) target = $region25
    $region24: #{tpu_custom_call.1} parent=1 // pred_region
      _
    $region25: #{tpu_custom_call.1} parent=1 // pred_fallthru
      _
    // Predicated region
    $region26: #{tpu_custom_call.1} parent=1 // pred_check
      _
    $region27: #{tpu_custom_call.1} parent=1 // pred_check_branch
      %58 = sbr.rel (0) target = $region29
    $region28: #{tpu_custom_call.1} parent=1 // pred_region
      %s60 = ssub.s32 1024, 1024
      %61 = vsyncadd [#allocation9], %s60
      %s62 = sshll.u32 [#allocation8], 4
      %s63 = int_to_ptr.vmem [resolvable:$true] %s62
      %68 = dma.hbm_to_vmem [thread:$0]  %s6, 1024, %s63, [#allocation9], 128, 128, 8
    $region29: #{tpu_custom_call.1} parent=1 // pred_fallthru
      _
    // Predicated region
    $region30: #{tpu_custom_call.1} parent=1 // pred_check
      _
    $region31: #{tpu_custom_call.1} parent=1 // pred_check_branch
      %70 = sbr.rel (0) target = $region33
    $region32: #{tpu_custom_call.1} parent=1 // pred_region
      _
    $region33: #{tpu_custom_call.1} parent=1 // pred_fallthru
      _
    // Predicated region
    $region34: #{tpu_custom_call.1} parent=1 // pred_check
      _
    $region35: #{tpu_custom_call.1} parent=1 // pred_check_branch
      %72 = sbr.rel (0) target = $region37
    $region36: #{tpu_custom_call.1} parent=1 // pred_region
      _
    $region37: #{tpu_custom_call.1} parent=1 // pred_fallthru
      _
    // Predicated region
    $region38: #{tpu_custom_call.1} parent=1 // pred_check
      _
    $region39: #{tpu_custom_call.1} parent=1 // pred_check_branch
      %74 = sbr.rel (0) target = $region41
    $region40: #{tpu_custom_call.1} parent=1 // pred_region
      _
    $region41: #{tpu_custom_call.1} parent=1 // pred_fallthru
      _
    // Predicated region
    $region42: #{tpu_custom_call.1} parent=1 // pred_check
      _
    $region43: #{tpu_custom_call.1} parent=1 // pred_check_branch
      %76 = sbr.rel (0) target = $region45
    $region44: #{tpu_custom_call.1} parent=1 // pred_region
      _
    $region45: #{tpu_custom_call.1} parent=1 // pred_fallthru
      _
    // Predicated region
    $region46: #{tpu_custom_call.1} parent=1 // pred_check
      _
    $region47: #{tpu_custom_call.1} parent=1 // pred_check_branch
      %78 = sbr.rel (0) target = $region49
    $region48: #{tpu_custom_call.1} parent=1 // pred_region
      %s80 = ssub.s32 512, 512
      %81 = vsyncadd [#allocation9], %s80
      %s82 = sshll.u32 [#allocation10], 4
      %s83 = int_to_ptr.vmem [resolvable:$true] %s82
      %88 = dma.hbm_to_vmem [thread:$0]  %s11, 512, %s83, [#allocation9], 128, 128, 8
    $region49: #{tpu_custom_call.1} parent=1 // pred_fallthru
      _
    // Predicated region
    $region50: #{tpu_custom_call.1} parent=1 // pred_check
      _
    $region51: #{tpu_custom_call.1} parent=1 // pred_check_branch
      %90 = sbr.rel (0) target = $region53
    $region52: #{tpu_custom_call.1} parent=1 // pred_region
      %91 = dma.done [#allocation3], 128
    $region53: #{tpu_custom_call.1} parent=1 // pred_fallthru
      _
    // Predicated region
    $region54: #{tpu_custom_call.1} parent=1 // pred_check
      _
    $region55: #{tpu_custom_call.1} parent=1 // pred_check_branch
      %93 = sbr.rel (0) target = $region57
    $region56: #{tpu_custom_call.1} parent=1 // pred_region
      %94 = dma.done [#allocation6], 128
    $region57: #{tpu_custom_call.1} parent=1 // pred_fallthru
      _
    // Predicated region
    $region58: #{tpu_custom_call.1} parent=1 // pred_check
      _
    $region59: #{tpu_custom_call.1} parent=1 // pred_check_branch
      %96 = sbr.rel (0) target = $region61
    $region60: #{tpu_custom_call.1} parent=1 // pred_region
      %97 = dma.done [#allocation6], 128
    $region61: #{tpu_custom_call.1} parent=1 // pred_fallthru
      _
    // Predicated region
    $region62: #{tpu_custom_call.1} parent=1 // pred_check
      _
    $region63: #{tpu_custom_call.1} parent=1 // pred_check_branch
      %99 = sbr.rel (0) target = $region65
    $region64: #{tpu_custom_call.1} parent=1 // pred_region
      %100 = dma.done [#allocation9], 1024
    $region65: #{tpu_custom_call.1} parent=1 // pred_fallthru
      _
    // Predicated region
    $region66: #{tpu_custom_call.1} parent=1 // pred_check
      _
    $region67: #{tpu_custom_call.1} parent=1 // pred_check_branch
      %102 = sbr.rel (0) target = $region69
    $region68: #{tpu_custom_call.1} parent=1 // pred_region
      %103 = dma.done [#allocation9], 512
    $region69: #{tpu_custom_call.1} parent=1 // pred_fallthru
      _
    %v104 = vld [vmem:[#allocation2] sm:$0xff]
    %v105 = vld [vmem:[#allocation5] sm:$0xff]
    %v106 = vld [vmem:[#allocation7] sm:$0xff]
    %v107 = vld [vmem:[%s4] sm:$0xff]
    %v108 = vld [vmem:[%s4 + $0x8] sm:$0xff]
    %v109 = vld [vmem:[%s4 + $0x10] sm:$0xff]
    %v110 = vld [vmem:[%s4 + $0x18] sm:$0xff]
    %v111 = vld [vmem:[%s4 + $0x20] sm:$0xff]
    %vm112 = vcmask 261120
    %v114 = vsel %vm112, %v105, 0
    %116 = vmatprep.subr.mxu0 0.0
    %117 = vmatpush1.msra.mxu0 0.0
    %118 = vmatprep.subr.mxu0 0.0
    %119 = vmatpush1.msra.mxu0 0.0
    %120 = vmatprep.subr.mxu0 0.0
    %121 = vmatpush1.msra.mxu0 0.0
    %122 = vmatprep.subr.mxu0 0.0
    %123 = vmatpush1.msra.mxu0 0.0
    %124 = vmatprep.subr.mxu0 0.0
    %125 = vmatpush1.msra.mxu0 0.0
    %126 = vmatprep.subr.mxu0 0.0
    %127 = vmatpush1.msra.mxu0 0.0
    %128 = vmatprep.subr.mxu0 0.0
    %129 = vmatpush1.msra.mxu0 0.0
    %130 = vmatprep.subr.mxu0 0.0
    %131 = vmatpush1.msra.mxu0 0.0
    %132 = vmatprep.subr.mxu0 0.0
    %133 = vmatpush1.msra.mxu0 0.0
    %134 = vmatprep.subr.mxu0 0.0
    %135 = vmatpush1.msra.mxu0 0.0
    %136 = vmatprep.subr.mxu0 0.0
    %137 = vmatpush1.msra.mxu0 0.0
    %138 = vmatprep.subr.mxu0 0.0
    %139 = vmatpush1.msra.mxu0 0.0
    %140 = vmatprep.subr.mxu0 0.0
    %141 = vmatpush1.msra.mxu0 %v111
    %142 = vmatprep.subr.mxu0 0.0
    %143 = vmatpush1.msra.mxu0 %v110
    %144 = vmatprep.subr.mxu0 0.0
    %145 = vmatpush1.msra.mxu0 %v109
    %146 = vmatprep.subr.mxu0 0.0
    %147 = vmatpush1.msra.mxu0 %v108
    %148 = vmatprep.subr.mxu0 0.0
    %149 = vmatpush2.msra.mxu0 0.0
    %150 = vmatprep.subr.mxu0 0.0
    %151 = vmatpush2.msra.mxu0 0.0
    %152 = vmatprep.subr.mxu0 0.0
    %153 = vmatpush2.msra.mxu0 0.0
    %154 = vmatprep.subr.mxu0 0.0
    %155 = vmatpush2.msra.mxu0 0.0
    %156 = vmatprep.subr.mxu0 0.0
    %157 = vmatpush2.msra.mxu0 0.0
    %158 = vmatprep.subr.mxu0 0.0
    %159 = vmatpush2.msra.mxu0 0.0
    %160 = vmatprep.subr.mxu0 0.0
    %161 = vmatpush2.msra.mxu0 0.0
    %162 = vmatprep.subr.mxu0 0.0
    %163 = vmatpush2.msra.mxu0 0.0
    %164 = vmatprep.subr.mxu0 0.0
    %165 = vmatpush2.msra.mxu0 0.0
    %166 = vmatprep.subr.mxu0 0.0
    %167 = vmatpush2.msra.mxu0 0.0
    %168 = vmatprep.subr.mxu0 0.0
    %169 = vmatpush2.msra.mxu0 0.0
    %170 = vmatprep.subr.mxu0 0.0
    %171 = vmatpush2.msra.mxu0 0.0
    %172 = vmatprep.subr.mxu0 0.0
    %173 = vmatpush2.msra.mxu0 0.0
    %174 = vmatprep.subr.mxu0 0.0
    %175 = vmatpush2.msra.mxu0 0.0
    %176 = vmatprep.subr.mxu0 0.0
    %177 = vmatpush2.msra.mxu0 0.0
    %178 = vmatprep.subr.mxu0 0.0
    %179 = vmatpush2.msra.mxu0 0.0
    %180 = vmatprep.mubr.f32.mxu0 0.0
    %181 = vmatmul.mubr.f32.gmra.mxu0 %v114
    %v182 = vpop.f32.mrf.mxu0
    %v183 = vadd.f32 0.0, %v182
    %v184 = vpop.f32.mrf.mxu0
    %185 = vdwg.mxu0
    %vm186 = vcmask 64512
    %v188 = vsel %vm186, %v104, 0
    %190 = vmatprep.subr.mxu0 0.0
    %191 = vmatpush1.msra.mxu0 0.0
    %192 = vmatprep.subr.mxu0 0.0
    %193 = vmatpush1.msra.mxu0 0.0
    %194 = vmatprep.subr.mxu0 0.0
    %195 = vmatpush1.msra.mxu0 0.0
    %196 = vmatprep.subr.mxu0 0.0
    %197 = vmatpush1.msra.mxu0 0.0
    %198 = vmatprep.subr.mxu0 0.0
    %199 = vmatpush1.msra.mxu0 0.0
    %200 = vmatprep.subr.mxu0 0.0
    %201 = vmatpush1.msra.mxu0 0.0
    %202 = vmatprep.subr.mxu0 0.0
    %203 = vmatpush1.msra.mxu0 0.0
    %204 = vmatprep.subr.mxu0 0.0
    %205 = vmatpush1.msra.mxu0 0.0
    %206 = vmatprep.subr.mxu0 0.0
    %207 = vmatpush1.msra.mxu0 0.0
    %208 = vmatprep.subr.mxu0 0.0
    %209 = vmatpush1.msra.mxu0 0.0
    %210 = vmatprep.subr.mxu0 0.0
    %211 = vmatpush1.msra.mxu0 0.0
    %212 = vmatprep.subr.mxu0 0.0
    %213 = vmatpush1.msra.mxu0 0.0
    %214 = vmatprep.subr.mxu0 0.0
    %215 = vmatpush1.msra.mxu0 0.0
    %216 = vmatprep.subr.mxu0 0.0
    %217 = vmatpush1.msra.mxu0 0.0
    %218 = vmatprep.subr.mxu0 0.0
    %219 = vmatpush1.msra.mxu0 0.0
    %220 = vmatprep.subr.mxu0 0.0
    %221 = vmatpush1.msra.mxu0 %v107
    %222 = vmatprep.subr.mxu0 0.0
    %223 = vmatpush2.msra.mxu0 0.0
    %224 = vmatprep.subr.mxu0 0.0
    %225 = vmatpush2.msra.mxu0 0.0
    %226 = vmatprep.subr.mxu0 0.0
    %227 = vmatpush2.msra.mxu0 0.0
    %228 = vmatprep.subr.mxu0 0.0
    %229 = vmatpush2.msra.mxu0 0.0
    %230 = vmatprep.subr.mxu0 0.0
    %231 = vmatpush2.msra.mxu0 0.0
    %232 = vmatprep.subr.mxu0 0.0
    %233 = vmatpush2.msra.mxu0 0.0
    %234 = vmatprep.subr.mxu0 0.0
    %235 = vmatpush2.msra.mxu0 0.0
    %236 = vmatprep.subr.mxu0 0.0
    %237 = vmatpush2.msra.mxu0 0.0
    %238 = vmatprep.subr.mxu0 0.0
    %239 = vmatpush2.msra.mxu0 0.0
    %240 = vmatprep.subr.mxu0 0.0
    %241 = vmatpush2.msra.mxu0 0.0
    %242 = vmatprep.subr.mxu0 0.0
    %243 = vmatpush2.msra.mxu0 0.0
    %244 = vmatprep.subr.mxu0 0.0
    %245 = vmatpush2.msra.mxu0 0.0
    %246 = vmatprep.subr.mxu0 0.0
    %247 = vmatpush2.msra.mxu0 0.0
    %248 = vmatprep.subr.mxu0 0.0
    %249 = vmatpush2.msra.mxu0 0.0
    %250 = vmatprep.subr.mxu0 0.0
    %251 = vmatpush2.msra.mxu0 0.0
    %252 = vmatprep.subr.mxu0 0.0
    %253 = vmatpush2.msra.mxu0 0.0
    %254 = vmatprep.mubr.f32.mxu0 0.0
    %255 = vmatmul.mubr.f32.gmra.mxu0 %v188
    %v256 = vpop.f32.mrf.mxu0
    %v257 = vadd.f32 %v183, %v256
    %v258 = vpop.f32.mrf.mxu0
    %259 = vdwg.mxu0
    %v260 = vld [vmem:[%s3] sm:$0x1]
    %v261 = vlaneseq
    %v262 = vshrl.u32 %v261, 7
    %v263 = vsub.s32 0, %v262
    %v264 = vrot.slane %v260, %v263
    %v265 = vadd.f32 %v257, %v264
    %v266 = vmax.f32 %v265, 0.0
    %v267 = vld [vmem:[%s5] sm:$0xff]
    %v268 = vld [vmem:[%s5 + $0x8] sm:$0xff]
    %v269 = vld [vmem:[%s5 + $0x10] sm:$0xff]
    %v270 = vld [vmem:[%s5 + $0x18] sm:$0xff]
    %v271 = vld [vmem:[%s3 + $0x1] sm:$0x1]
    %v272 = vlaneseq
    %v273 = vshrl.u32 %v272, 7
    %v274 = vsub.s32 0, %v273
    %v275 = vrot.slane %v271, %v274
    %v277 = vsel %vm112, %v266, 0
    %279 = vmatprep.subr.mxu0 0.0
    %280 = vmatpush1.msra.mxu0 0.0
    %281 = vmatprep.subr.mxu0 0.0
    %282 = vmatpush1.msra.mxu0 0.0
    %283 = vmatprep.subr.mxu0 0.0
    %284 = vmatpush1.msra.mxu0 0.0
    %285 = vmatprep.subr.mxu0 0.0
    %286 = vmatpush1.msra.mxu0 0.0
    %287 = vmatprep.subr.mxu0 0.0
    %288 = vmatpush1.msra.mxu0 0.0
    %289 = vmatprep.subr.mxu0 0.0
    %290 = vmatpush1.msra.mxu0 0.0
    %291 = vmatprep.subr.mxu0 0.0
    %292 = vmatpush1.msra.mxu0 0.0
    %293 = vmatprep.subr.mxu0 0.0
    %294 = vmatpush1.msra.mxu0 0.0
    %295 = vmatprep.subr.mxu0 0.0
    %296 = vmatpush1.msra.mxu0 0.0
    %297 = vmatprep.subr.mxu0 0.0
    %298 = vmatpush1.msra.mxu0 0.0
    %299 = vmatprep.subr.mxu0 0.0
    %300 = vmatpush1.msra.mxu0 0.0
    %301 = vmatprep.subr.mxu0 0.0
    %302 = vmatpush1.msra.mxu0 0.0
    %303 = vmatprep.subr.mxu0 0.0
    %304 = vmatpush1.msra.mxu0 %v270
    %305 = vmatprep.subr.mxu0 0.0
    %306 = vmatpush1.msra.mxu0 %v269
    %307 = vmatprep.subr.mxu0 0.0
    %308 = vmatpush1.msra.mxu0 %v268
    %309 = vmatprep.subr.mxu0 0.0
    %310 = vmatpush1.msra.mxu0 %v267
    %311 = vmatprep.subr.mxu0 0.0
    %312 = vmatpush2.msra.mxu0 0.0
    %313 = vmatprep.subr.mxu0 0.0
    %314 = vmatpush2.msra.mxu0 0.0
    %315 = vmatprep.subr.mxu0 0.0
    %316 = vmatpush2.msra.mxu0 0.0
    %317 = vmatprep.subr.mxu0 0.0
    %318 = vmatpush2.msra.mxu0 0.0
    %319 = vmatprep.subr.mxu0 0.0
    %320 = vmatpush2.msra.mxu0 0.0
    %321 = vmatprep.subr.mxu0 0.0
    %322 = vmatpush2.msra.mxu0 0.0
    %323 = vmatprep.subr.mxu0 0.0
    %324 = vmatpush2.msra.mxu0 0.0
    %325 = vmatprep.subr.mxu0 0.0
    %326 = vmatpush2.msra.mxu0 0.0
    %327 = vmatprep.subr.mxu0 0.0
    %328 = vmatpush2.msra.mxu0 0.0
    %329 = vmatprep.subr.mxu0 0.0
    %330 = vmatpush2.msra.mxu0 0.0
    %331 = vmatprep.subr.mxu0 0.0
    %332 = vmatpush2.msra.mxu0 0.0
    %333 = vmatprep.subr.mxu0 0.0
    %334 = vmatpush2.msra.mxu0 0.0
    %335 = vmatprep.subr.mxu0 0.0
    %336 = vmatpush2.msra.mxu0 0.0
    %337 = vmatprep.subr.mxu0 0.0
    %338 = vmatpush2.msra.mxu0 0.0
    %339 = vmatprep.subr.mxu0 0.0
    %340 = vmatpush2.msra.mxu0 0.0
    %341 = vmatprep.subr.mxu0 0.0
    %342 = vmatpush2.msra.mxu0 0.0
    %343 = vmatprep.mubr.f32.mxu0 0.0
    %344 = vmatmul.mubr.f32.gmra.mxu0 %v277
    %v345 = vpop.f32.mrf.mxu0
    %v346 = vadd.f32 %v275, %v345
    %v347 = vpop.f32.mrf.mxu0
    %348 = vdwg.mxu0
    %v349 = vadd.f32 %v266, %v346
    %v350 = vld [vmem:[%s3 + $0x2] sm:$0x1]
    %v351 = vld [vmem:[%s3 + $0x3] sm:$0x1]
    %v352 = vsel %vm112, %v349, 0.0
    %353 = vadd.xlane.f32.xlu0 %v352
    %v354 = vpop.xlane.xlu0 %353
    %v355 = vrcp.pop 32.0
    %v356 = vmul.f32 %v354, %v355
    %v357 = vsub.f32 %v349, %v356
    %v358 = vmul.f32 %v357, %v357
    %v359 = vsel %vm112, %v358, 0.0
    %360 = vadd.xlane.f32.xlu0 %v359
    %v361 = vpop.xlane.xlu0 %360
    %v362 = vmul.f32 %v361, %v355
    %v363 = vadd.f32 %v362, 1e-05
    %v364 = vrsqrt.pop %v363
    %v365 = vmul.f32 %v357, %v364
    %v366 = vlaneseq
    %v367 = vshrl.u32 %v366, 7
    %v368 = vsub.s32 0, %v367
    %v369 = vrot.slane %v350, %v368
    %v370 = vmul.f32 %v365, %v369
    %v371 = vlaneseq
    %v372 = vshrl.u32 %v371, 7
    %v373 = vsub.s32 0, %v372
    %v374 = vrot.slane %v351, %v373
    %v375 = vadd.f32 %v370, %v374
    %v376 = vld [vmem:[#allocation8] sm:$0xff]
    %v377 = vld [vmem:[#allocation8 + $0x8] sm:$0xff]
    %v378 = vld [vmem:[#allocation8 + $0x10] sm:$0xff]
    %v379 = vld [vmem:[#allocation8 + $0x18] sm:$0xff]
    %v380 = vld [vmem:[%s3 + $0x4] sm:$0x1]
    %v381 = vlaneseq
    %v382 = vshrl.u32 %v381, 7
    %v383 = vsub.s32 0, %v382
    %v384 = vrot.slane %v380, %v383
    %v386 = vsel %vm112, %v375, 0
    %388 = vmatprep.subr.mxu0 0.0
    %389 = vmatpush1.msra.mxu0 0.0
    %390 = vmatprep.subr.mxu0 0.0
    %391 = vmatpush1.msra.mxu0 0.0
    %392 = vmatprep.subr.mxu0 0.0
    %393 = vmatpush1.msra.mxu0 0.0
    %394 = vmatprep.subr.mxu0 0.0
    %395 = vmatpush1.msra.mxu0 0.0
    %396 = vmatprep.subr.mxu0 0.0
    %397 = vmatpush1.msra.mxu0 0.0
    %398 = vmatprep.subr.mxu0 0.0
    %399 = vmatpush1.msra.mxu0 0.0
    %400 = vmatprep.subr.mxu0 0.0
    %401 = vmatpush1.msra.mxu0 0.0
    %402 = vmatprep.subr.mxu0 0.0
    %403 = vmatpush1.msra.mxu0 0.0
    %404 = vmatprep.subr.mxu0 0.0
    %405 = vmatpush1.msra.mxu0 0.0
    %406 = vmatprep.subr.mxu0 0.0
    %407 = vmatpush1.msra.mxu0 0.0
    %408 = vmatprep.subr.mxu0 0.0
    %409 = vmatpush1.msra.mxu0 0.0
    %410 = vmatprep.subr.mxu0 0.0
    %411 = vmatpush1.msra.mxu0 0.0
    %412 = vmatprep.subr.mxu0 0.0
    %413 = vmatpush1.msra.mxu0 %v379
    %414 = vmatprep.subr.mxu0 0.0
    %415 = vmatpush1.msra.mxu0 %v378
    %416 = vmatprep.subr.mxu0 0.0
    %417 = vmatpush1.msra.mxu0 %v377
    %418 = vmatprep.subr.mxu0 0.0
    %419 = vmatpush1.msra.mxu0 %v376
    %420 = vmatprep.subr.mxu0 0.0
    %421 = vmatpush2.msra.mxu0 0.0
    %422 = vmatprep.subr.mxu0 0.0
    %423 = vmatpush2.msra.mxu0 0.0
    %424 = vmatprep.subr.mxu0 0.0
    %425 = vmatpush2.msra.mxu0 0.0
    %426 = vmatprep.subr.mxu0 0.0
    %427 = vmatpush2.msra.mxu0 0.0
    %428 = vmatprep.subr.mxu0 0.0
    %429 = vmatpush2.msra.mxu0 0.0
    %430 = vmatprep.subr.mxu0 0.0
    %431 = vmatpush2.msra.mxu0 0.0
    %432 = vmatprep.subr.mxu0 0.0
    %433 = vmatpush2.msra.mxu0 0.0
    %434 = vmatprep.subr.mxu0 0.0
    %435 = vmatpush2.msra.mxu0 0.0
    %436 = vmatprep.subr.mxu0 0.0
    %437 = vmatpush2.msra.mxu0 0.0
    %438 = vmatprep.subr.mxu0 0.0
    %439 = vmatpush2.msra.mxu0 0.0
    %440 = vmatprep.subr.mxu0 0.0
    %441 = vmatpush2.msra.mxu0 0.0
    %442 = vmatprep.subr.mxu0 0.0
    %443 = vmatpush2.msra.mxu0 0.0
    %444 = vmatprep.subr.mxu0 0.0
    %445 = vmatpush2.msra.mxu0 0.0
    %446 = vmatprep.subr.mxu0 0.0
    %447 = vmatpush2.msra.mxu0 0.0
    %448 = vmatprep.subr.mxu0 0.0
    %449 = vmatpush2.msra.mxu0 0.0
    %450 = vmatprep.subr.mxu0 0.0
    %451 = vmatpush2.msra.mxu0 0.0
    %452 = vmatprep.mubr.f32.mxu0 0.0
    %453 = vmatmul.mubr.f32.gmra.mxu0 %v386
    %v454 = vpop.f32.mrf.mxu0
    %v455 = vadd.f32 %v384, %v454
    %v456 = vpop.f32.mrf.mxu0
    %457 = vdwg.mxu0
    %v458 = vmax.f32 %v455, 0.0
    %v459 = vld [vmem:[%s7] sm:$0xff]
    %v460 = vld [vmem:[%s7 + $0x8] sm:$0xff]
    %v461 = vld [vmem:[%s7 + $0x10] sm:$0xff]
    %v462 = vld [vmem:[%s7 + $0x18] sm:$0xff]
    %v463 = vld [vmem:[%s7 + $0x20] sm:$0xff]
    %v464 = vld [vmem:[%s7 + $0x28] sm:$0xff]
    %v465 = vld [vmem:[%s7 + $0x30] sm:$0xff]
    %v466 = vld [vmem:[%s7 + $0x38] sm:$0xff]
    %v467 = vld [vmem:[%s3 + $0x5] sm:$0x1]
    %v468 = vlaneseq
    %v469 = vshrl.u32 %v468, 7
    %v470 = vsub.s32 0, %v469
    %v471 = vrot.slane %v467, %v470
    %vm472 = vcmask 523264
    %v474 = vsel %vm472, %v458, 0
    %476 = vmatprep.subr.mxu0 0.0
    %477 = vmatpush1.msra.mxu0 0.0
    %478 = vmatprep.subr.mxu0 0.0
    %479 = vmatpush1.msra.mxu0 0.0
    %480 = vmatprep.subr.mxu0 0.0
    %481 = vmatpush1.msra.mxu0 0.0
    %482 = vmatprep.subr.mxu0 0.0
    %483 = vmatpush1.msra.mxu0 0.0
    %484 = vmatprep.subr.mxu0 0.0
    %485 = vmatpush1.msra.mxu0 0.0
    %486 = vmatprep.subr.mxu0 0.0
    %487 = vmatpush1.msra.mxu0 0.0
    %488 = vmatprep.subr.mxu0 0.0
    %489 = vmatpush1.msra.mxu0 0.0
    %490 = vmatprep.subr.mxu0 0.0
    %491 = vmatpush1.msra.mxu0 0.0
    %492 = vmatprep.subr.mxu0 0.0
    %493 = vmatpush1.msra.mxu0 %v466
    %494 = vmatprep.subr.mxu0 0.0
    %495 = vmatpush1.msra.mxu0 %v465
    %496 = vmatprep.subr.mxu0 0.0
    %497 = vmatpush1.msra.mxu0 %v464
    %498 = vmatprep.subr.mxu0 0.0
    %499 = vmatpush1.msra.mxu0 %v463
    %500 = vmatprep.subr.mxu0 0.0
    %501 = vmatpush1.msra.mxu0 %v462
    %502 = vmatprep.subr.mxu0 0.0
    %503 = vmatpush1.msra.mxu0 %v461
    %504 = vmatprep.subr.mxu0 0.0
    %505 = vmatpush1.msra.mxu0 %v460
    %506 = vmatprep.subr.mxu0 0.0
    %507 = vmatpush1.msra.mxu0 %v459
    %508 = vmatprep.subr.mxu0 0.0
    %509 = vmatpush2.msra.mxu0 0.0
    %510 = vmatprep.subr.mxu0 0.0
    %511 = vmatpush2.msra.mxu0 0.0
    %512 = vmatprep.subr.mxu0 0.0
    %513 = vmatpush2.msra.mxu0 0.0
    %514 = vmatprep.subr.mxu0 0.0
    %515 = vmatpush2.msra.mxu0 0.0
    %516 = vmatprep.subr.mxu0 0.0
    %517 = vmatpush2.msra.mxu0 0.0
    %518 = vmatprep.subr.mxu0 0.0
    %519 = vmatpush2.msra.mxu0 0.0
    %520 = vmatprep.subr.mxu0 0.0
    %521 = vmatpush2.msra.mxu0 0.0
    %522 = vmatprep.subr.mxu0 0.0
    %523 = vmatpush2.msra.mxu0 0.0
    %524 = vmatprep.subr.mxu0 0.0
    %525 = vmatpush2.msra.mxu0 0.0
    %526 = vmatprep.subr.mxu0 0.0
    %527 = vmatpush2.msra.mxu0 0.0
    %528 = vmatprep.subr.mxu0 0.0
    %529 = vmatpush2.msra.mxu0 0.0
    %530 = vmatprep.subr.mxu0 0.0
    %531 = vmatpush2.msra.mxu0 0.0
    %532 = vmatprep.subr.mxu0 0.0
    %533 = vmatpush2.msra.mxu0 0.0
    %534 = vmatprep.subr.mxu0 0.0
    %535 = vmatpush2.msra.mxu0 0.0
    %536 = vmatprep.subr.mxu0 0.0
    %537 = vmatpush2.msra.mxu0 0.0
    %538 = vmatprep.subr.mxu0 0.0
    %539 = vmatpush2.msra.mxu0 0.0
    %540 = vmatprep.mubr.f32.mxu0 0.0
    %541 = vmatmul.mubr.f32.gmra.mxu0 %v474
    %v542 = vpop.f32.mrf.mxu0
    %v543 = vadd.f32 %v471, %v542
    %v544 = vpop.f32.mrf.mxu0
    %545 = vdwg.mxu0
    %v546 = vadd.f32 %v375, %v543
    %v547 = vld [vmem:[%s3 + $0x6] sm:$0x1]
    %v548 = vld [vmem:[%s3 + $0x7] sm:$0x1]
    %v549 = vsel %vm112, %v546, 0.0
    %550 = vadd.xlane.f32.xlu0 %v549
    %v551 = vpop.xlane.xlu0 %550
    %v552 = vmul.f32 %v551, %v355
    %v553 = vsub.f32 %v546, %v552
    %v554 = vmul.f32 %v553, %v553
    %v555 = vsel %vm112, %v554, 0.0
    %556 = vadd.xlane.f32.xlu0 %v555
    %v557 = vpop.xlane.xlu0 %556
    %v558 = vmul.f32 %v557, %v355
    %v559 = vadd.f32 %v558, 1e-05
    %v560 = vrsqrt.pop %v559
    %v561 = vmul.f32 %v553, %v560
    %v562 = vlaneseq
    %v563 = vshrl.u32 %v562, 7
    %v564 = vsub.s32 0, %v563
    %v565 = vrot.slane %v547, %v564
    %v566 = vmul.f32 %v561, %v565
    %v567 = vlaneseq
    %v568 = vshrl.u32 %v567, 7
    %v569 = vsub.s32 0, %v568
    %v570 = vrot.slane %v548, %v569
    %v571 = vadd.f32 %v566, %v570
    %s572 = scalar_lea.vmem %s5, 32
    %v573 = vld [vmem:[%s572] sm:$0xff]
    %v574 = vld [vmem:[%s572 + $0x8] sm:$0xff]
    %v575 = vld [vmem:[%s572 + $0x10] sm:$0xff]
    %v576 = vld [vmem:[%s572 + $0x18] sm:$0xff]
    %v577 = vld [vmem:[%s3 + $0x8] sm:$0x1]
    %v578 = vlaneseq
    %v579 = vshrl.u32 %v578, 7
    %v580 = vsub.s32 0, %v579
    %v581 = vrot.slane %v577, %v580
    %v583 = vsel %vm112, %v571, 0
    %585 = vmatprep.subr.mxu0 0.0
    %586 = vmatpush1.msra.mxu0 0.0
    %587 = vmatprep.subr.mxu0 0.0
    %588 = vmatpush1.msra.mxu0 0.0
    %589 = vmatprep.subr.mxu0 0.0
    %590 = vmatpush1.msra.mxu0 0.0
    %591 = vmatprep.subr.mxu0 0.0
    %592 = vmatpush1.msra.mxu0 0.0
    %593 = vmatprep.subr.mxu0 0.0
    %594 = vmatpush1.msra.mxu0 0.0
    %595 = vmatprep.subr.mxu0 0.0
    %596 = vmatpush1.msra.mxu0 0.0
    %597 = vmatprep.subr.mxu0 0.0
    %598 = vmatpush1.msra.mxu0 0.0
    %599 = vmatprep.subr.mxu0 0.0
    %600 = vmatpush1.msra.mxu0 0.0
    %601 = vmatprep.subr.mxu0 0.0
    %602 = vmatpush1.msra.mxu0 0.0
    %603 = vmatprep.subr.mxu0 0.0
    %604 = vmatpush1.msra.mxu0 0.0
    %605 = vmatprep.subr.mxu0 0.0
    %606 = vmatpush1.msra.mxu0 0.0
    %607 = vmatprep.subr.mxu0 0.0
    %608 = vmatpush1.msra.mxu0 0.0
    %609 = vmatprep.subr.mxu0 0.0
    %610 = vmatpush1.msra.mxu0 %v576
    %611 = vmatprep.subr.mxu0 0.0
    %612 = vmatpush1.msra.mxu0 %v575
    %613 = vmatprep.subr.mxu0 0.0
    %614 = vmatpush1.msra.mxu0 %v574
    %615 = vmatprep.subr.mxu0 0.0
    %616 = vmatpush1.msra.mxu0 %v573
    %617 = vmatprep.subr.mxu0 0.0
    %618 = vmatpush2.msra.mxu0 0.0
    %619 = vmatprep.subr.mxu0 0.0
    %620 = vmatpush2.msra.mxu0 0.0
    %621 = vmatprep.subr.mxu0 0.0
    %622 = vmatpush2.msra.mxu0 0.0
    %623 = vmatprep.subr.mxu0 0.0
    %624 = vmatpush2.msra.mxu0 0.0
    %625 = vmatprep.subr.mxu0 0.0
    %626 = vmatpush2.msra.mxu0 0.0
    %627 = vmatprep.subr.mxu0 0.0
    %628 = vmatpush2.msra.mxu0 0.0
    %629 = vmatprep.subr.mxu0 0.0
    %630 = vmatpush2.msra.mxu0 0.0
    %631 = vmatprep.subr.mxu0 0.0
    %632 = vmatpush2.msra.mxu0 0.0
    %633 = vmatprep.subr.mxu0 0.0
    %634 = vmatpush2.msra.mxu0 0.0
    %635 = vmatprep.subr.mxu0 0.0
    %636 = vmatpush2.msra.mxu0 0.0
    %637 = vmatprep.subr.mxu0 0.0
    %638 = vmatpush2.msra.mxu0 0.0
    %639 = vmatprep.subr.mxu0 0.0
    %640 = vmatpush2.msra.mxu0 0.0
    %641 = vmatprep.subr.mxu0 0.0
    %642 = vmatpush2.msra.mxu0 0.0
    %643 = vmatprep.subr.mxu0 0.0
    %644 = vmatpush2.msra.mxu0 0.0
    %645 = vmatprep.subr.mxu0 0.0
    %646 = vmatpush2.msra.mxu0 0.0
    %647 = vmatprep.subr.mxu0 0.0
    %648 = vmatpush2.msra.mxu0 0.0
    %649 = vmatprep.mubr.f32.mxu0 0.0
    %650 = vmatmul.mubr.f32.gmra.mxu0 %v583
    %v651 = vpop.f32.mrf.mxu0
    %v652 = vadd.f32 %v581, %v651
    %v653 = vpop.f32.mrf.mxu0
    %654 = vdwg.mxu0
    %v655 = vadd.f32 %v571, %v652
    %v656 = vld [vmem:[%s3 + $0x9] sm:$0x1]
    %v657 = vld [vmem:[%s3 + $0xa] sm:$0x1]
    %v658 = vsel %vm112, %v655, 0.0
    %659 = vadd.xlane.f32.xlu0 %v658
    %v660 = vpop.xlane.xlu0 %659
    %v661 = vmul.f32 %v660, %v355
    %v662 = vsub.f32 %v655, %v661
    %v663 = vmul.f32 %v662, %v662
    %v664 = vsel %vm112, %v663, 0.0
    %665 = vadd.xlane.f32.xlu0 %v664
    %v666 = vpop.xlane.xlu0 %665
    %v667 = vmul.f32 %v666, %v355
    %v668 = vadd.f32 %v667, 1e-05
    %v669 = vrsqrt.pop %v668
    %v670 = vmul.f32 %v662, %v669
    %v671 = vlaneseq
    %v672 = vshrl.u32 %v671, 7
    %v673 = vsub.s32 0, %v672
    %v674 = vrot.slane %v656, %v673
    %v675 = vmul.f32 %v670, %v674
    %v676 = vlaneseq
    %v677 = vshrl.u32 %v676, 7
    %v678 = vsub.s32 0, %v677
    %v679 = vrot.slane %v657, %v678
    %v680 = vadd.f32 %v675, %v679
    %s681 = scalar_lea.vmem [#allocation8], 32
    %v682 = vld [vmem:[%s681] sm:$0xff]
    %v683 = vld [vmem:[%s681 + $0x8] sm:$0xff]
    %v684 = vld [vmem:[%s681 + $0x10] sm:$0xff]
    %v685 = vld [vmem:[%s681 + $0x18] sm:$0xff]
    %v686 = vld [vmem:[%s3 + $0xb] sm:$0x1]
    %v687 = vlaneseq
    %v688 = vshrl.u32 %v687, 7
    %v689 = vsub.s32 0, %v688
    %v690 = vrot.slane %v686, %v689
    %v692 = vsel %vm112, %v680, 0
    %694 = vmatprep.subr.mxu0 0.0
    %695 = vmatpush1.msra.mxu0 0.0
    %696 = vmatprep.subr.mxu0 0.0
    %697 = vmatpush1.msra.mxu0 0.0
    %698 = vmatprep.subr.mxu0 0.0
    %699 = vmatpush1.msra.mxu0 0.0
    %700 = vmatprep.subr.mxu0 0.0
    %701 = vmatpush1.msra.mxu0 0.0
    %702 = vmatprep.subr.mxu0 0.0
    %703 = vmatpush1.msra.mxu0 0.0
    %704 = vmatprep.subr.mxu0 0.0
    %705 = vmatpush1.msra.mxu0 0.0
    %706 = vmatprep.subr.mxu0 0.0
    %707 = vmatpush1.msra.mxu0 0.0
    %708 = vmatprep.subr.mxu0 0.0
    %709 = vmatpush1.msra.mxu0 0.0
    %710 = vmatprep.subr.mxu0 0.0
    %711 = vmatpush1.msra.mxu0 0.0
    %712 = vmatprep.subr.mxu0 0.0
    %713 = vmatpush1.msra.mxu0 0.0
    %714 = vmatprep.subr.mxu0 0.0
    %715 = vmatpush1.msra.mxu0 0.0
    %716 = vmatprep.subr.mxu0 0.0
    %717 = vmatpush1.msra.mxu0 0.0
    %718 = vmatprep.subr.mxu0 0.0
    %719 = vmatpush1.msra.mxu0 %v685
    %720 = vmatprep.subr.mxu0 0.0
    %721 = vmatpush1.msra.mxu0 %v684
    %722 = vmatprep.subr.mxu0 0.0
    %723 = vmatpush1.msra.mxu0 %v683
    %724 = vmatprep.subr.mxu0 0.0
    %725 = vmatpush1.msra.mxu0 %v682
    %726 = vmatprep.subr.mxu0 0.0
    %727 = vmatpush2.msra.mxu0 0.0
    %728 = vmatprep.subr.mxu0 0.0
    %729 = vmatpush2.msra.mxu0 0.0
    %730 = vmatprep.subr.mxu0 0.0
    %731 = vmatpush2.msra.mxu0 0.0
    %732 = vmatprep.subr.mxu0 0.0
    %733 = vmatpush2.msra.mxu0 0.0
    %734 = vmatprep.subr.mxu0 0.0
    %735 = vmatpush2.msra.mxu0 0.0
    %736 = vmatprep.subr.mxu0 0.0
    %737 = vmatpush2.msra.mxu0 0.0
    %738 = vmatprep.subr.mxu0 0.0
    %739 = vmatpush2.msra.mxu0 0.0
    %740 = vmatprep.subr.mxu0 0.0
    %741 = vmatpush2.msra.mxu0 0.0
    %742 = vmatprep.subr.mxu0 0.0
    %743 = vmatpush2.msra.mxu0 0.0
    %744 = vmatprep.subr.mxu0 0.0
    %745 = vmatpush2.msra.mxu0 0.0
    %746 = vmatprep.subr.mxu0 0.0
    %747 = vmatpush2.msra.mxu0 0.0
    %748 = vmatprep.subr.mxu0 0.0
    %749 = vmatpush2.msra.mxu0 0.0
    %750 = vmatprep.subr.mxu0 0.0
    %751 = vmatpush2.msra.mxu0 0.0
    %752 = vmatprep.subr.mxu0 0.0
    %753 = vmatpush2.msra.mxu0 0.0
    %754 = vmatprep.subr.mxu0 0.0
    %755 = vmatpush2.msra.mxu0 0.0
    %756 = vmatprep.subr.mxu0 0.0
    %757 = vmatpush2.msra.mxu0 0.0
    %758 = vmatprep.mubr.f32.mxu0 0.0
    %759 = vmatmul.mubr.f32.gmra.mxu0 %v692
    %v760 = vpop.f32.mrf.mxu0
    %v761 = vadd.f32 %v690, %v760
    %v762 = vpop.f32.mrf.mxu0
    %763 = vdwg.mxu0
    %v764 = vmax.f32 %v761, 0.0
    %s765 = scalar_lea.vmem %s7, 64
    %v766 = vld [vmem:[%s765] sm:$0xff]
    %v767 = vld [vmem:[%s765 + $0x8] sm:$0xff]
    %v768 = vld [vmem:[%s765 + $0x10] sm:$0xff]
    %v769 = vld [vmem:[%s765 + $0x18] sm:$0xff]
    %v770 = vld [vmem:[%s765 + $0x20] sm:$0xff]
    %v771 = vld [vmem:[%s765 + $0x28] sm:$0xff]
    %v772 = vld [vmem:[%s765 + $0x30] sm:$0xff]
    %v773 = vld [vmem:[%s765 + $0x38] sm:$0xff]
    %v774 = vld [vmem:[%s3 + $0xc] sm:$0x1]
    %v775 = vlaneseq
    %v776 = vshrl.u32 %v775, 7
    %v777 = vsub.s32 0, %v776
    %v778 = vrot.slane %v774, %v777
    %v780 = vsel %vm472, %v764, 0
    %782 = vmatprep.subr.mxu0 0.0
    %783 = vmatpush1.msra.mxu0 0.0
    %784 = vmatprep.subr.mxu0 0.0
    %785 = vmatpush1.msra.mxu0 0.0
    %786 = vmatprep.subr.mxu0 0.0
    %787 = vmatpush1.msra.mxu0 0.0
    %788 = vmatprep.subr.mxu0 0.0
    %789 = vmatpush1.msra.mxu0 0.0
    %790 = vmatprep.subr.mxu0 0.0
    %791 = vmatpush1.msra.mxu0 0.0
    %792 = vmatprep.subr.mxu0 0.0
    %793 = vmatpush1.msra.mxu0 0.0
    %794 = vmatprep.subr.mxu0 0.0
    %795 = vmatpush1.msra.mxu0 0.0
    %796 = vmatprep.subr.mxu0 0.0
    %797 = vmatpush1.msra.mxu0 0.0
    %798 = vmatprep.subr.mxu0 0.0
    %799 = vmatpush1.msra.mxu0 %v773
    %800 = vmatprep.subr.mxu0 0.0
    %801 = vmatpush1.msra.mxu0 %v772
    %802 = vmatprep.subr.mxu0 0.0
    %803 = vmatpush1.msra.mxu0 %v771
    %804 = vmatprep.subr.mxu0 0.0
    %805 = vmatpush1.msra.mxu0 %v770
    %806 = vmatprep.subr.mxu0 0.0
    %807 = vmatpush1.msra.mxu0 %v769
    %808 = vmatprep.subr.mxu0 0.0
    %809 = vmatpush1.msra.mxu0 %v768
    %810 = vmatprep.subr.mxu0 0.0
    %811 = vmatpush1.msra.mxu0 %v767
    %812 = vmatprep.subr.mxu0 0.0
    %813 = vmatpush1.msra.mxu0 %v766
    %814 = vmatprep.subr.mxu0 0.0
    %815 = vmatpush2.msra.mxu0 0.0
    %816 = vmatprep.subr.mxu0 0.0
    %817 = vmatpush2.msra.mxu0 0.0
    %818 = vmatprep.subr.mxu0 0.0
    %819 = vmatpush2.msra.mxu0 0.0
    %820 = vmatprep.subr.mxu0 0.0
    %821 = vmatpush2.msra.mxu0 0.0
    %822 = vmatprep.subr.mxu0 0.0
    %823 = vmatpush2.msra.mxu0 0.0
    %824 = vmatprep.subr.mxu0 0.0
    %825 = vmatpush2.msra.mxu0 0.0
    %826 = vmatprep.subr.mxu0 0.0
    %827 = vmatpush2.msra.mxu0 0.0
    %828 = vmatprep.subr.mxu0 0.0
    %829 = vmatpush2.msra.mxu0 0.0
    %830 = vmatprep.subr.mxu0 0.0
    %831 = vmatpush2.msra.mxu0 0.0
    %832 = vmatprep.subr.mxu0 0.0
    %833 = vmatpush2.msra.mxu0 0.0
    %834 = vmatprep.subr.mxu0 0.0
    %835 = vmatpush2.msra.mxu0 0.0
    %836 = vmatprep.subr.mxu0 0.0
    %837 = vmatpush2.msra.mxu0 0.0
    %838 = vmatprep.subr.mxu0 0.0
    %839 = vmatpush2.msra.mxu0 0.0
    %840 = vmatprep.subr.mxu0 0.0
    %841 = vmatpush2.msra.mxu0 0.0
    %842 = vmatprep.subr.mxu0 0.0
    %843 = vmatpush2.msra.mxu0 0.0
    %844 = vmatprep.subr.mxu0 0.0
    %845 = vmatpush2.msra.mxu0 0.0
    %846 = vmatprep.mubr.f32.mxu0 0.0
    %847 = vmatmul.mubr.f32.gmra.mxu0 %v780
    %v848 = vpop.f32.mrf.mxu0
    %v849 = vadd.f32 %v778, %v848
    %v850 = vpop.f32.mrf.mxu0
    %851 = vdwg.mxu0
    %v852 = vadd.f32 %v680, %v849
    %v853 = vld [vmem:[%s3 + $0xd] sm:$0x1]
    %v854 = vld [vmem:[%s3 + $0xe] sm:$0x1]
    %v855 = vsel %vm112, %v852, 0.0
    %856 = vadd.xlane.f32.xlu0 %v855
    %v857 = vpop.xlane.xlu0 %856
    %v858 = vmul.f32 %v857, %v355
    %v859 = vsub.f32 %v852, %v858
    %v860 = vmul.f32 %v859, %v859
    %v861 = vsel %vm112, %v860, 0.0
    %862 = vadd.xlane.f32.xlu0 %v861
    %v863 = vpop.xlane.xlu0 %862
    %v864 = vmul.f32 %v863, %v355
    %v865 = vadd.f32 %v864, 1e-05
    %v866 = vrsqrt.pop %v865
    %v867 = vmul.f32 %v859, %v866
    %v868 = vlaneseq
    %v869 = vshrl.u32 %v868, 7
    %v870 = vsub.s32 0, %v869
    %v871 = vrot.slane %v853, %v870
    %v872 = vmul.f32 %v867, %v871
    %v873 = vlaneseq
    %v874 = vshrl.u32 %v873, 7
    %v875 = vsub.s32 0, %v874
    %v876 = vrot.slane %v854, %v875
    %v877 = vadd.f32 %v872, %v876
    %v878 = vld [vmem:[%s8] sm:$0xff]
    %v879 = vld [vmem:[%s8 + $0x8] sm:$0xff]
    %v880 = vld [vmem:[%s8 + $0x10] sm:$0xff]
    %v881 = vld [vmem:[%s8 + $0x18] sm:$0xff]
    %v882 = vld [vmem:[%s9] sm:$0xff]
    %v883 = vld [vmem:[%s9 + $0x8] sm:$0xff]
    %v884 = vld [vmem:[%s9 + $0x10] sm:$0xff]
    %v885 = vld [vmem:[%s9 + $0x18] sm:$0xff]
    %v886 = vld [vmem:[%s9 + $0x20] sm:$0xff]
    %v887 = vld [vmem:[%s9 + $0x28] sm:$0xff]
    %v888 = vld [vmem:[%s9 + $0x30] sm:$0xff]
    %v889 = vld [vmem:[%s9 + $0x38] sm:$0xff]
    %v891 = vsel %vm472, %v106, 0
    %893 = vmatprep.subr.mxu0 0.0
    %894 = vmatpush1.msra.mxu0 0.0
    %895 = vmatprep.subr.mxu0 0.0
    %896 = vmatpush1.msra.mxu0 0.0
    %897 = vmatprep.subr.mxu0 0.0
    %898 = vmatpush1.msra.mxu0 0.0
    %899 = vmatprep.subr.mxu0 0.0
    %900 = vmatpush1.msra.mxu0 0.0
    %901 = vmatprep.subr.mxu0 0.0
    %902 = vmatpush1.msra.mxu0 0.0
    %903 = vmatprep.subr.mxu0 0.0
    %904 = vmatpush1.msra.mxu0 0.0
    %905 = vmatprep.subr.mxu0 0.0
    %906 = vmatpush1.msra.mxu0 0.0
    %907 = vmatprep.subr.mxu0 0.0
    %908 = vmatpush1.msra.mxu0 0.0
    %909 = vmatprep.subr.mxu0 0.0
    %910 = vmatpush1.msra.mxu0 %v889
    %911 = vmatprep.subr.mxu0 0.0
    %912 = vmatpush1.msra.mxu0 %v888
    %913 = vmatprep.subr.mxu0 0.0
    %914 = vmatpush1.msra.mxu0 %v887
    %915 = vmatprep.subr.mxu0 0.0
    %916 = vmatpush1.msra.mxu0 %v886
    %917 = vmatprep.subr.mxu0 0.0
    %918 = vmatpush1.msra.mxu0 %v885
    %919 = vmatprep.subr.mxu0 0.0
    %920 = vmatpush1.msra.mxu0 %v884
    %921 = vmatprep.subr.mxu0 0.0
    %922 = vmatpush1.msra.mxu0 %v883
    %923 = vmatprep.subr.mxu0 0.0
    %924 = vmatpush1.msra.mxu0 %v882
    %925 = vmatprep.subr.mxu0 0.0
    %926 = vmatpush2.msra.mxu0 0.0
    %927 = vmatprep.subr.mxu0 0.0
    %928 = vmatpush2.msra.mxu0 0.0
    %929 = vmatprep.subr.mxu0 0.0
    %930 = vmatpush2.msra.mxu0 0.0
    %931 = vmatprep.subr.mxu0 0.0
    %932 = vmatpush2.msra.mxu0 0.0
    %933 = vmatprep.subr.mxu0 0.0
    %934 = vmatpush2.msra.mxu0 0.0
    %935 = vmatprep.subr.mxu0 0.0
    %936 = vmatpush2.msra.mxu0 0.0
    %937 = vmatprep.subr.mxu0 0.0
    %938 = vmatpush2.msra.mxu0 0.0
    %939 = vmatprep.subr.mxu0 0.0
    %940 = vmatpush2.msra.mxu0 0.0
    %941 = vmatprep.subr.mxu0 0.0
    %942 = vmatpush2.msra.mxu0 0.0
    %943 = vmatprep.subr.mxu0 0.0
    %944 = vmatpush2.msra.mxu0 0.0
    %945 = vmatprep.subr.mxu0 0.0
    %946 = vmatpush2.msra.mxu0 0.0
    %947 = vmatprep.subr.mxu0 0.0
    %948 = vmatpush2.msra.mxu0 0.0
    %949 = vmatprep.subr.mxu0 0.0
    %950 = vmatpush2.msra.mxu0 0.0
    %951 = vmatprep.subr.mxu0 0.0
    %952 = vmatpush2.msra.mxu0 0.0
    %953 = vmatprep.subr.mxu0 0.0
    %954 = vmatpush2.msra.mxu0 0.0
    %955 = vmatprep.subr.mxu0 0.0
    %956 = vmatpush2.msra.mxu0 0.0
    %957 = vmatprep.mubr.f32.mxu0 0.0
    %958 = vmatmul.mubr.f32.gmra.mxu0 %v891
    %v959 = vpop.f32.mrf.mxu0
    %v960 = vadd.f32 0.0, %v959
    %v961 = vpop.f32.mrf.mxu0
    %962 = vdwg.mxu0
    %v964 = vsel %vm112, %v877, 0
    %966 = vmatprep.subr.mxu0 0.0
    %967 = vmatpush1.msra.mxu0 0.0
    %968 = vmatprep.subr.mxu0 0.0
    %969 = vmatpush1.msra.mxu0 0.0
    %970 = vmatprep.subr.mxu0 0.0
    %971 = vmatpush1.msra.mxu0 0.0
    %972 = vmatprep.subr.mxu0 0.0
    %973 = vmatpush1.msra.mxu0 0.0
    %974 = vmatprep.subr.mxu0 0.0
    %975 = vmatpush1.msra.mxu0 0.0
    %976 = vmatprep.subr.mxu0 0.0
    %977 = vmatpush1.msra.mxu0 0.0
    %978 = vmatprep.subr.mxu0 0.0
    %979 = vmatpush1.msra.mxu0 0.0
    %980 = vmatprep.subr.mxu0 0.0
    %981 = vmatpush1.msra.mxu0 0.0
    %982 = vmatprep.subr.mxu0 0.0
    %983 = vmatpush1.msra.mxu0 0.0
    %984 = vmatprep.subr.mxu0 0.0
    %985 = vmatpush1.msra.mxu0 0.0
    %986 = vmatprep.subr.mxu0 0.0
    %987 = vmatpush1.msra.mxu0 0.0
    %988 = vmatprep.subr.mxu0 0.0
    %989 = vmatpush1.msra.mxu0 0.0
    %990 = vmatprep.subr.mxu0 0.0
    %991 = vmatpush1.msra.mxu0 %v881
    %992 = vmatprep.subr.mxu0 0.0
    %993 = vmatpush1.msra.mxu0 %v880
    %994 = vmatprep.subr.mxu0 0.0
    %995 = vmatpush1.msra.mxu0 %v879
    %996 = vmatprep.subr.mxu0 0.0
    %997 = vmatpush1.msra.mxu0 %v878
    %998 = vmatprep.subr.mxu0 0.0
    %999 = vmatpush2.msra.mxu0 0.0
    %1000 = vmatprep.subr.mxu0 0.0
    %1001 = vmatpush2.msra.mxu0 0.0
    %1002 = vmatprep.subr.mxu0 0.0
    %1003 = vmatpush2.msra.mxu0 0.0
    %1004 = vmatprep.subr.mxu0 0.0
    %1005 = vmatpush2.msra.mxu0 0.0
    %1006 = vmatprep.subr.mxu0 0.0
    %1007 = vmatpush2.msra.mxu0 0.0
    %1008 = vmatprep.subr.mxu0 0.0
    %1009 = vmatpush2.msra.mxu0 0.0
    %1010 = vmatprep.subr.mxu0 0.0
    %1011 = vmatpush2.msra.mxu0 0.0
    %1012 = vmatprep.subr.mxu0 0.0
    %1013 = vmatpush2.msra.mxu0 0.0
    %1014 = vmatprep.subr.mxu0 0.0
    %1015 = vmatpush2.msra.mxu0 0.0
    %1016 = vmatprep.subr.mxu0 0.0
    %1017 = vmatpush2.msra.mxu0 0.0
    %1018 = vmatprep.subr.mxu0 0.0
    %1019 = vmatpush2.msra.mxu0 0.0
    %1020 = vmatprep.subr.mxu0 0.0
    %1021 = vmatpush2.msra.mxu0 0.0
    %1022 = vmatprep.subr.mxu0 0.0
    %1023 = vmatpush2.msra.mxu0 0.0
    %1024 = vmatprep.subr.mxu0 0.0
    %1025 = vmatpush2.msra.mxu0 0.0
    %1026 = vmatprep.subr.mxu0 0.0
    %1027 = vmatpush2.msra.mxu0 0.0
    %1028 = vmatprep.subr.mxu0 0.0
    %1029 = vmatpush2.msra.mxu0 0.0
    %1030 = vmatprep.mubr.f32.mxu0 0.0
    %1031 = vmatmul.mubr.f32.gmra.mxu0 %v964
    %v1032 = vpop.f32.mrf.mxu0
    %v1033 = vadd.f32 %v960, %v1032
    %v1034 = vpop.f32.mrf.mxu0
    %1035 = vdwg.mxu0
    %v1036 = vld [vmem:[%s3 + $0xf] sm:$0x1]
    %v1037 = vlaneseq
    %v1038 = vshrl.u32 %v1037, 7
    %v1039 = vsub.s32 0, %v1038
    %v1040 = vrot.slane %v1036, %v1039
    %v1041 = vadd.f32 %v1033, %v1040
    %v1042 = vxor.u32 %v1041, 2147483648
    %v1043 = vmul.f32 %v1042, 1.442695
    %v1044 = vpow.pop %v1043
    %v1045 = vadd.f32 %v1044, 1.0
    %v1046 = vrcp.pop %v1045
    %v1047 = vmul.f32 1.0, %v1046
    %s1048 = scalar_lea.vmem %s8, 32
    %v1049 = vld [vmem:[%s1048] sm:$0xff]
    %v1050 = vld [vmem:[%s1048 + $0x8] sm:$0xff]
    %v1051 = vld [vmem:[%s1048 + $0x10] sm:$0xff]
    %v1052 = vld [vmem:[%s1048 + $0x18] sm:$0xff]
    %s1053 = scalar_lea.vmem %s9, 64
    %v1054 = vld [vmem:[%s1053] sm:$0xff]
    %v1055 = vld [vmem:[%s1053 + $0x8] sm:$0xff]
    %v1056 = vld [vmem:[%s1053 + $0x10] sm:$0xff]
    %v1057 = vld [vmem:[%s1053 + $0x18] sm:$0xff]
    %v1058 = vld [vmem:[%s1053 + $0x20] sm:$0xff]
    %v1059 = vld [vmem:[%s1053 + $0x28] sm:$0xff]
    %v1060 = vld [vmem:[%s1053 + $0x30] sm:$0xff]
    %v1061 = vld [vmem:[%s1053 + $0x38] sm:$0xff]
    %1062 = vmatprep.subr.mxu0 0.0
    %1063 = vmatpush1.msra.mxu0 0.0
    %1064 = vmatprep.subr.mxu0 0.0
    %1065 = vmatpush1.msra.mxu0 0.0
    %1066 = vmatprep.subr.mxu0 0.0
    %1067 = vmatpush1.msra.mxu0 0.0
    %1068 = vmatprep.subr.mxu0 0.0
    %1069 = vmatpush1.msra.mxu0 0.0
    %1070 = vmatprep.subr.mxu0 0.0
    %1071 = vmatpush1.msra.mxu0 0.0
    %1072 = vmatprep.subr.mxu0 0.0
    %1073 = vmatpush1.msra.mxu0 0.0
    %1074 = vmatprep.subr.mxu0 0.0
    %1075 = vmatpush1.msra.mxu0 0.0
    %1076 = vmatprep.subr.mxu0 0.0
    %1077 = vmatpush1.msra.mxu0 0.0
    %1078 = vmatprep.subr.mxu0 0.0
    %1079 = vmatpush1.msra.mxu0 %v1061
    %1080 = vmatprep.subr.mxu0 0.0
    %1081 = vmatpush1.msra.mxu0 %v1060
    %1082 = vmatprep.subr.mxu0 0.0
    %1083 = vmatpush1.msra.mxu0 %v1059
    %1084 = vmatprep.subr.mxu0 0.0
    %1085 = vmatpush1.msra.mxu0 %v1058
    %1086 = vmatprep.subr.mxu0 0.0
    %1087 = vmatpush1.msra.mxu0 %v1057
    %1088 = vmatprep.subr.mxu0 0.0
    %1089 = vmatpush1.msra.mxu0 %v1056
    %1090 = vmatprep.subr.mxu0 0.0
    %1091 = vmatpush1.msra.mxu0 %v1055
    %1092 = vmatprep.subr.mxu0 0.0
    %1093 = vmatpush1.msra.mxu0 %v1054
    %1094 = vmatprep.subr.mxu0 0.0
    %1095 = vmatpush2.msra.mxu0 0.0
    %1096 = vmatprep.subr.mxu0 0.0
    %1097 = vmatpush2.msra.mxu0 0.0
    %1098 = vmatprep.subr.mxu0 0.0
    %1099 = vmatpush2.msra.mxu0 0.0
    %1100 = vmatprep.subr.mxu0 0.0
    %1101 = vmatpush2.msra.mxu0 0.0
    %1102 = vmatprep.subr.mxu0 0.0
    %1103 = vmatpush2.msra.mxu0 0.0
    %1104 = vmatprep.subr.mxu0 0.0
    %1105 = vmatpush2.msra.mxu0 0.0
    %1106 = vmatprep.subr.mxu0 0.0
    %1107 = vmatpush2.msra.mxu0 0.0
    %1108 = vmatprep.subr.mxu0 0.0
    %1109 = vmatpush2.msra.mxu0 0.0
    %1110 = vmatprep.subr.mxu0 0.0
    %1111 = vmatpush2.msra.mxu0 0.0
    %1112 = vmatprep.subr.mxu0 0.0
    %1113 = vmatpush2.msra.mxu0 0.0
    %1114 = vmatprep.subr.mxu0 0.0
    %1115 = vmatpush2.msra.mxu0 0.0
    %1116 = vmatprep.subr.mxu0 0.0
    %1117 = vmatpush2.msra.mxu0 0.0
    %1118 = vmatprep.subr.mxu0 0.0
    %1119 = vmatpush2.msra.mxu0 0.0
    %1120 = vmatprep.subr.mxu0 0.0
    %1121 = vmatpush2.msra.mxu0 0.0
    %1122 = vmatprep.subr.mxu0 0.0
    %1123 = vmatpush2.msra.mxu0 0.0
    %1124 = vmatprep.subr.mxu0 0.0
    %1125 = vmatpush2.msra.mxu0 0.0
    %1126 = vmatprep.mubr.f32.mxu0 0.0
    %1127 = vmatmul.mubr.f32.gmra.mxu0 %v891
    %v1128 = vpop.f32.mrf.mxu0
    %v1129 = vadd.f32 0.0, %v1128
    %v1130 = vpop.f32.mrf.mxu0
    %1131 = vdwg.mxu0
    %1132 = vmatprep.subr.mxu0 0.0
    %1133 = vmatpush1.msra.mxu0 0.0
    %1134 = vmatprep.subr.mxu0 0.0
    %1135 = vmatpush1.msra.mxu0 0.0
    %1136 = vmatprep.subr.mxu0 0.0
    %1137 = vmatpush1.msra.mxu0 0.0
    %1138 = vmatprep.subr.mxu0 0.0
    %1139 = vmatpush1.msra.mxu0 0.0
    %1140 = vmatprep.subr.mxu0 0.0
    %1141 = vmatpush1.msra.mxu0 0.0
    %1142 = vmatprep.subr.mxu0 0.0
    %1143 = vmatpush1.msra.mxu0 0.0
    %1144 = vmatprep.subr.mxu0 0.0
    %1145 = vmatpush1.msra.mxu0 0.0
    %1146 = vmatprep.subr.mxu0 0.0
    %1147 = vmatpush1.msra.mxu0 0.0
    %1148 = vmatprep.subr.mxu0 0.0
    %1149 = vmatpush1.msra.mxu0 0.0
    %1150 = vmatprep.subr.mxu0 0.0
    %1151 = vmatpush1.msra.mxu0 0.0
    %1152 = vmatprep.subr.mxu0 0.0
    %1153 = vmatpush1.msra.mxu0 0.0
    %1154 = vmatprep.subr.mxu0 0.0
    %1155 = vmatpush1.msra.mxu0 0.0
    %1156 = vmatprep.subr.mxu0 0.0
    %1157 = vmatpush1.msra.mxu0 %v1052
    %1158 = vmatprep.subr.mxu0 0.0
    %1159 = vmatpush1.msra.mxu0 %v1051
    %1160 = vmatprep.subr.mxu0 0.0
    %1161 = vmatpush1.msra.mxu0 %v1050
    %1162 = vmatprep.subr.mxu0 0.0
    %1163 = vmatpush1.msra.mxu0 %v1049
    %1164 = vmatprep.subr.mxu0 0.0
    %1165 = vmatpush2.msra.mxu0 0.0
    %1166 = vmatprep.subr.mxu0 0.0
    %1167 = vmatpush2.msra.mxu0 0.0
    %1168 = vmatprep.subr.mxu0 0.0
    %1169 = vmatpush2.msra.mxu0 0.0
    %1170 = vmatprep.subr.mxu0 0.0
    %1171 = vmatpush2.msra.mxu0 0.0
    %1172 = vmatprep.subr.mxu0 0.0
    %1173 = vmatpush2.msra.mxu0 0.0
    %1174 = vmatprep.subr.mxu0 0.0
    %1175 = vmatpush2.msra.mxu0 0.0
    %1176 = vmatprep.subr.mxu0 0.0
    %1177 = vmatpush2.msra.mxu0 0.0
    %1178 = vmatprep.subr.mxu0 0.0
    %1179 = vmatpush2.msra.mxu0 0.0
    %1180 = vmatprep.subr.mxu0 0.0
    %1181 = vmatpush2.msra.mxu0 0.0
    %1182 = vmatprep.subr.mxu0 0.0
    %1183 = vmatpush2.msra.mxu0 0.0
    %1184 = vmatprep.subr.mxu0 0.0
    %1185 = vmatpush2.msra.mxu0 0.0
    %1186 = vmatprep.subr.mxu0 0.0
    %1187 = vmatpush2.msra.mxu0 0.0
    %1188 = vmatprep.subr.mxu0 0.0
    %1189 = vmatpush2.msra.mxu0 0.0
    %1190 = vmatprep.subr.mxu0 0.0
    %1191 = vmatpush2.msra.mxu0 0.0
    %1192 = vmatprep.subr.mxu0 0.0
    %1193 = vmatpush2.msra.mxu0 0.0
    %1194 = vmatprep.subr.mxu0 0.0
    %1195 = vmatpush2.msra.mxu0 0.0
    %1196 = vmatprep.mubr.f32.mxu0 0.0
    %1197 = vmatmul.mubr.f32.gmra.mxu0 %v964
    %v1198 = vpop.f32.mrf.mxu0
    %v1199 = vadd.f32 %v1129, %v1198
    %v1200 = vpop.f32.mrf.mxu0
    %1201 = vdwg.mxu0
    %v1202 = vld [vmem:[%s3 + $0x10] sm:$0x1]
    %v1203 = vlaneseq
    %v1204 = vshrl.u32 %v1203, 7
    %v1205 = vsub.s32 0, %v1204
    %v1206 = vrot.slane %v1202, %v1205
    %v1207 = vadd.f32 %v1199, %v1206
    %v1208 = vxor.u32 %v1207, 2147483648
    %v1209 = vmul.f32 %v1208, 1.442695
    %v1210 = vpow.pop %v1209
    %v1211 = vadd.f32 %v1210, 1.0
    %v1212 = vrcp.pop %v1211
    %v1213 = vmul.f32 1.0, %v1212
    %s1214 = scalar_lea.vmem %s8, 64
    %v1215 = vld [vmem:[%s1214] sm:$0xff]
    %v1216 = vld [vmem:[%s1214 + $0x8] sm:$0xff]
    %v1217 = vld [vmem:[%s1214 + $0x10] sm:$0xff]
    %v1218 = vld [vmem:[%s1214 + $0x18] sm:$0xff]
    %v1219 = vld [vmem:[%s3 + $0x11] sm:$0x1]
    %v1220 = vlaneseq
    %v1221 = vshrl.u32 %v1220, 7
    %v1222 = vsub.s32 0, %v1221
    %v1223 = vrot.slane %v1219, %v1222
    %1224 = vmatprep.subr.mxu0 0.0
    %1225 = vmatpush1.msra.mxu0 0.0
    %1226 = vmatprep.subr.mxu0 0.0
    %1227 = vmatpush1.msra.mxu0 0.0
    %1228 = vmatprep.subr.mxu0 0.0
    %1229 = vmatpush1.msra.mxu0 0.0
    %1230 = vmatprep.subr.mxu0 0.0
    %1231 = vmatpush1.msra.mxu0 0.0
    %1232 = vmatprep.subr.mxu0 0.0
    %1233 = vmatpush1.msra.mxu0 0.0
    %1234 = vmatprep.subr.mxu0 0.0
    %1235 = vmatpush1.msra.mxu0 0.0
    %1236 = vmatprep.subr.mxu0 0.0
    %1237 = vmatpush1.msra.mxu0 0.0
    %1238 = vmatprep.subr.mxu0 0.0
    %1239 = vmatpush1.msra.mxu0 0.0
    %1240 = vmatprep.subr.mxu0 0.0
    %1241 = vmatpush1.msra.mxu0 0.0
    %1242 = vmatprep.subr.mxu0 0.0
    %1243 = vmatpush1.msra.mxu0 0.0
    %1244 = vmatprep.subr.mxu0 0.0
    %1245 = vmatpush1.msra.mxu0 0.0
    %1246 = vmatprep.subr.mxu0 0.0
    %1247 = vmatpush1.msra.mxu0 0.0
    %1248 = vmatprep.subr.mxu0 0.0
    %1249 = vmatpush1.msra.mxu0 %v1218
    %1250 = vmatprep.subr.mxu0 0.0
    %1251 = vmatpush1.msra.mxu0 %v1217
    %1252 = vmatprep.subr.mxu0 0.0
    %1253 = vmatpush1.msra.mxu0 %v1216
    %1254 = vmatprep.subr.mxu0 0.0
    %1255 = vmatpush1.msra.mxu0 %v1215
    %1256 = vmatprep.subr.mxu0 0.0
    %1257 = vmatpush2.msra.mxu0 0.0
    %1258 = vmatprep.subr.mxu0 0.0
    %1259 = vmatpush2.msra.mxu0 0.0
    %1260 = vmatprep.subr.mxu0 0.0
    %1261 = vmatpush2.msra.mxu0 0.0
    %1262 = vmatprep.subr.mxu0 0.0
    %1263 = vmatpush2.msra.mxu0 0.0
    %1264 = vmatprep.subr.mxu0 0.0
    %1265 = vmatpush2.msra.mxu0 0.0
    %1266 = vmatprep.subr.mxu0 0.0
    %1267 = vmatpush2.msra.mxu0 0.0
    %1268 = vmatprep.subr.mxu0 0.0
    %1269 = vmatpush2.msra.mxu0 0.0
    %1270 = vmatprep.subr.mxu0 0.0
    %1271 = vmatpush2.msra.mxu0 0.0
    %1272 = vmatprep.subr.mxu0 0.0
    %1273 = vmatpush2.msra.mxu0 0.0
    %1274 = vmatprep.subr.mxu0 0.0
    %1275 = vmatpush2.msra.mxu0 0.0
    %1276 = vmatprep.subr.mxu0 0.0
    %1277 = vmatpush2.msra.mxu0 0.0
    %1278 = vmatprep.subr.mxu0 0.0
    %1279 = vmatpush2.msra.mxu0 0.0
    %1280 = vmatprep.subr.mxu0 0.0
    %1281 = vmatpush2.msra.mxu0 0.0
    %1282 = vmatprep.subr.mxu0 0.0
    %1283 = vmatpush2.msra.mxu0 0.0
    %1284 = vmatprep.subr.mxu0 0.0
    %1285 = vmatpush2.msra.mxu0 0.0
    %1286 = vmatprep.subr.mxu0 0.0
    %1287 = vmatpush2.msra.mxu0 0.0
    %1288 = vmatprep.mubr.f32.mxu0 0.0
    %1289 = vmatmul.mubr.f32.gmra.mxu0 %v964
    %v1290 = vpop.f32.mrf.mxu0
    %v1291 = vadd.f32 %v1223, %v1290
    %v1292 = vpop.f32.mrf.mxu0
    %1293 = vdwg.mxu0
    %s1294 = scalar_lea.vmem %s9, 128
    %v1295 = vld [vmem:[%s1294] sm:$0xff]
    %v1296 = vld [vmem:[%s1294 + $0x8] sm:$0xff]
    %v1297 = vld [vmem:[%s1294 + $0x10] sm:$0xff]
    %v1298 = vld [vmem:[%s1294 + $0x18] sm:$0xff]
    %v1299 = vld [vmem:[%s1294 + $0x20] sm:$0xff]
    %v1300 = vld [vmem:[%s1294 + $0x28] sm:$0xff]
    %v1301 = vld [vmem:[%s1294 + $0x30] sm:$0xff]
    %v1302 = vld [vmem:[%s1294 + $0x38] sm:$0xff]
    %v1303 = vld [vmem:[%s3 + $0x12] sm:$0x1]
    %v1304 = vlaneseq
    %v1305 = vshrl.u32 %v1304, 7
    %v1306 = vsub.s32 0, %v1305
    %v1307 = vrot.slane %v1303, %v1306
    %1308 = vmatprep.subr.mxu0 0.0
    %1309 = vmatpush1.msra.mxu0 0.0
    %1310 = vmatprep.subr.mxu0 0.0
    %1311 = vmatpush1.msra.mxu0 0.0
    %1312 = vmatprep.subr.mxu0 0.0
    %1313 = vmatpush1.msra.mxu0 0.0
    %1314 = vmatprep.subr.mxu0 0.0
    %1315 = vmatpush1.msra.mxu0 0.0
    %1316 = vmatprep.subr.mxu0 0.0
    %1317 = vmatpush1.msra.mxu0 0.0
    %1318 = vmatprep.subr.mxu0 0.0
    %1319 = vmatpush1.msra.mxu0 0.0
    %1320 = vmatprep.subr.mxu0 0.0
    %1321 = vmatpush1.msra.mxu0 0.0
    %1322 = vmatprep.subr.mxu0 0.0
    %1323 = vmatpush1.msra.mxu0 0.0
    %1324 = vmatprep.subr.mxu0 0.0
    %1325 = vmatpush1.msra.mxu0 %v1302
    %1326 = vmatprep.subr.mxu0 0.0
    %1327 = vmatpush1.msra.mxu0 %v1301
    %1328 = vmatprep.subr.mxu0 0.0
    %1329 = vmatpush1.msra.mxu0 %v1300
    %1330 = vmatprep.subr.mxu0 0.0
    %1331 = vmatpush1.msra.mxu0 %v1299
    %1332 = vmatprep.subr.mxu0 0.0
    %1333 = vmatpush1.msra.mxu0 %v1298
    %1334 = vmatprep.subr.mxu0 0.0
    %1335 = vmatpush1.msra.mxu0 %v1297
    %1336 = vmatprep.subr.mxu0 0.0
    %1337 = vmatpush1.msra.mxu0 %v1296
    %1338 = vmatprep.subr.mxu0 0.0
    %1339 = vmatpush1.msra.mxu0 %v1295
    %1340 = vmatprep.subr.mxu0 0.0
    %1341 = vmatpush2.msra.mxu0 0.0
    %1342 = vmatprep.subr.mxu0 0.0
    %1343 = vmatpush2.msra.mxu0 0.0
    %1344 = vmatprep.subr.mxu0 0.0
    %1345 = vmatpush2.msra.mxu0 0.0
    %1346 = vmatprep.subr.mxu0 0.0
    %1347 = vmatpush2.msra.mxu0 0.0
    %1348 = vmatprep.subr.mxu0 0.0
    %1349 = vmatpush2.msra.mxu0 0.0
    %1350 = vmatprep.subr.mxu0 0.0
    %1351 = vmatpush2.msra.mxu0 0.0
    %1352 = vmatprep.subr.mxu0 0.0
    %1353 = vmatpush2.msra.mxu0 0.0
    %1354 = vmatprep.subr.mxu0 0.0
    %1355 = vmatpush2.msra.mxu0 0.0
    %1356 = vmatprep.subr.mxu0 0.0
    %1357 = vmatpush2.msra.mxu0 0.0
    %1358 = vmatprep.subr.mxu0 0.0
    %1359 = vmatpush2.msra.mxu0 0.0
    %1360 = vmatprep.subr.mxu0 0.0
    %1361 = vmatpush2.msra.mxu0 0.0
    %1362 = vmatprep.subr.mxu0 0.0
    %1363 = vmatpush2.msra.mxu0 0.0
    %1364 = vmatprep.subr.mxu0 0.0
    %1365 = vmatpush2.msra.mxu0 0.0
    %1366 = vmatprep.subr.mxu0 0.0
    %1367 = vmatpush2.msra.mxu0 0.0
    %1368 = vmatprep.subr.mxu0 0.0
    %1369 = vmatpush2.msra.mxu0 0.0
    %1370 = vmatprep.subr.mxu0 0.0
    %1371 = vmatpush2.msra.mxu0 0.0
    %1372 = vmatprep.mubr.f32.mxu0 0.0
    %1373 = vmatmul.mubr.f32.gmra.mxu0 %v891
    %v1374 = vpop.f32.mrf.mxu0
    %v1375 = vadd.f32 %v1307, %v1374
    %v1376 = vpop.f32.mrf.mxu0
    %1377 = vdwg.mxu0
    %v1378 = vmul.f32 %v1047, %v1375
    %v1379 = vadd.f32 %v1291, %v1378
    %v1380 = vtanh.pop %v1379
    %v1381 = vsub.f32 1.0, %v1213
    %v1382 = vmul.f32 %v1381, %v1380
    %v1383 = vmul.f32 %v1213, %v106
    %v1384 = vadd.f32 %v1382, %v1383
    %v1385 = vld [vmem:[%s10] sm:$0xff]
    %v1386 = vld [vmem:[%s10 + $0x8] sm:$0xff]
    %v1387 = vld [vmem:[%s10 + $0x10] sm:$0xff]
    %v1388 = vld [vmem:[%s10 + $0x18] sm:$0xff]
    %v1389 = vld [vmem:[%s10 + $0x20] sm:$0xff]
    %v1390 = vld [vmem:[%s10 + $0x28] sm:$0xff]
    %v1391 = vld [vmem:[%s10 + $0x30] sm:$0xff]
    %v1392 = vld [vmem:[%s10 + $0x38] sm:$0xff]
    %v1393 = vld [vmem:[%s3 + $0x13] sm:$0x1]
    %v1394 = vlaneseq
    %v1395 = vshrl.u32 %v1394, 7
    %v1396 = vsub.s32 0, %v1395
    %v1397 = vrot.slane %v1393, %v1396
    %v1399 = vsel %vm472, %v1384, 0
    %1401 = vmatprep.subr.mxu0 0.0
    %1402 = vmatpush1.msra.mxu0 0.0
    %1403 = vmatprep.subr.mxu0 0.0
    %1404 = vmatpush1.msra.mxu0 0.0
    %1405 = vmatprep.subr.mxu0 0.0
    %1406 = vmatpush1.msra.mxu0 0.0
    %1407 = vmatprep.subr.mxu0 0.0
    %1408 = vmatpush1.msra.mxu0 0.0
    %1409 = vmatprep.subr.mxu0 0.0
    %1410 = vmatpush1.msra.mxu0 0.0
    %1411 = vmatprep.subr.mxu0 0.0
    %1412 = vmatpush1.msra.mxu0 0.0
    %1413 = vmatprep.subr.mxu0 0.0
    %1414 = vmatpush1.msra.mxu0 0.0
    %1415 = vmatprep.subr.mxu0 0.0
    %1416 = vmatpush1.msra.mxu0 0.0
    %1417 = vmatprep.subr.mxu0 0.0
    %1418 = vmatpush1.msra.mxu0 %v1392
    %1419 = vmatprep.subr.mxu0 0.0
    %1420 = vmatpush1.msra.mxu0 %v1391
    %1421 = vmatprep.subr.mxu0 0.0
    %1422 = vmatpush1.msra.mxu0 %v1390
    %1423 = vmatprep.subr.mxu0 0.0
    %1424 = vmatpush1.msra.mxu0 %v1389
    %1425 = vmatprep.subr.mxu0 0.0
    %1426 = vmatpush1.msra.mxu0 %v1388
    %1427 = vmatprep.subr.mxu0 0.0
    %1428 = vmatpush1.msra.mxu0 %v1387
    %1429 = vmatprep.subr.mxu0 0.0
    %1430 = vmatpush1.msra.mxu0 %v1386
    %1431 = vmatprep.subr.mxu0 0.0
    %1432 = vmatpush1.msra.mxu0 %v1385
    %1433 = vmatprep.subr.mxu0 0.0
    %1434 = vmatpush2.msra.mxu0 0.0
    %1435 = vmatprep.subr.mxu0 0.0
    %1436 = vmatpush2.msra.mxu0 0.0
    %1437 = vmatprep.subr.mxu0 0.0
    %1438 = vmatpush2.msra.mxu0 0.0
    %1439 = vmatprep.subr.mxu0 0.0
    %1440 = vmatpush2.msra.mxu0 0.0
    %1441 = vmatprep.subr.mxu0 0.0
    %1442 = vmatpush2.msra.mxu0 0.0
    %1443 = vmatprep.subr.mxu0 0.0
    %1444 = vmatpush2.msra.mxu0 0.0
    %1445 = vmatprep.subr.mxu0 0.0
    %1446 = vmatpush2.msra.mxu0 0.0
    %1447 = vmatprep.subr.mxu0 0.0
    %1448 = vmatpush2.msra.mxu0 0.0
    %1449 = vmatprep.subr.mxu0 0.0
    %1450 = vmatpush2.msra.mxu0 0.0
    %1451 = vmatprep.subr.mxu0 0.0
    %1452 = vmatpush2.msra.mxu0 0.0
    %1453 = vmatprep.subr.mxu0 0.0
    %1454 = vmatpush2.msra.mxu0 0.0
    %1455 = vmatprep.subr.mxu0 0.0
    %1456 = vmatpush2.msra.mxu0 0.0
    %1457 = vmatprep.subr.mxu0 0.0
    %1458 = vmatpush2.msra.mxu0 0.0
    %1459 = vmatprep.subr.mxu0 0.0
    %1460 = vmatpush2.msra.mxu0 0.0
    %1461 = vmatprep.subr.mxu0 0.0
    %1462 = vmatpush2.msra.mxu0 0.0
    %1463 = vmatprep.subr.mxu0 0.0
    %1464 = vmatpush2.msra.mxu0 0.0
    %1465 = vmatprep.mubr.f32.mxu0 0.0
    %1466 = vmatmul.mubr.f32.gmra.mxu0 %v1399
    %v1467 = vpop.f32.mrf.mxu0
    %v1468 = vadd.f32 %v1397, %v1467
    %v1469 = vpop.f32.mrf.mxu0
    %1470 = vdwg.mxu0
    %v1471 = vmax.f32 %v1468, 0.0
    %v1472 = vld [vmem:[#allocation10] sm:$0xff]
    %v1473 = vld [vmem:[#allocation10 + $0x8] sm:$0xff]
    %v1474 = vld [vmem:[#allocation10 + $0x10] sm:$0xff]
    %v1475 = vld [vmem:[#allocation10 + $0x18] sm:$0xff]
    %v1476 = vld [vmem:[%s3 + $0x14] sm:$0x1]
    %v1477 = vlaneseq
    %v1478 = vshrl.u32 %v1477, 7
    %v1479 = vsub.s32 0, %v1478
    %v1480 = vrot.slane %v1476, %v1479
    %v1482 = vsel %vm112, %v1471, 0
    %1484 = vmatprep.subr.mxu0 0.0
    %1485 = vmatpush1.msra.mxu0 0.0
    %1486 = vmatprep.subr.mxu0 0.0
    %1487 = vmatpush1.msra.mxu0 0.0
    %1488 = vmatprep.subr.mxu0 0.0
    %1489 = vmatpush1.msra.mxu0 0.0
    %1490 = vmatprep.subr.mxu0 0.0
    %1491 = vmatpush1.msra.mxu0 0.0
    %1492 = vmatprep.subr.mxu0 0.0
    %1493 = vmatpush1.msra.mxu0 0.0
    %1494 = vmatprep.subr.mxu0 0.0
    %1495 = vmatpush1.msra.mxu0 0.0
    %1496 = vmatprep.subr.mxu0 0.0
    %1497 = vmatpush1.msra.mxu0 0.0
    %1498 = vmatprep.subr.mxu0 0.0
    %1499 = vmatpush1.msra.mxu0 0.0
    %1500 = vmatprep.subr.mxu0 0.0
    %1501 = vmatpush1.msra.mxu0 0.0
    %1502 = vmatprep.subr.mxu0 0.0
    %1503 = vmatpush1.msra.mxu0 0.0
    %1504 = vmatprep.subr.mxu0 0.0
    %1505 = vmatpush1.msra.mxu0 0.0
    %1506 = vmatprep.subr.mxu0 0.0
    %1507 = vmatpush1.msra.mxu0 0.0
    %1508 = vmatprep.subr.mxu0 0.0
    %1509 = vmatpush1.msra.mxu0 %v1475
    %1510 = vmatprep.subr.mxu0 0.0
    %1511 = vmatpush1.msra.mxu0 %v1474
    %1512 = vmatprep.subr.mxu0 0.0
    %1513 = vmatpush1.msra.mxu0 %v1473
    %1514 = vmatprep.subr.mxu0 0.0
    %1515 = vmatpush1.msra.mxu0 %v1472
    %1516 = vmatprep.subr.mxu0 0.0
    %1517 = vmatpush2.msra.mxu0 0.0
    %1518 = vmatprep.subr.mxu0 0.0
    %1519 = vmatpush2.msra.mxu0 0.0
    %1520 = vmatprep.subr.mxu0 0.0
    %1521 = vmatpush2.msra.mxu0 0.0
    %1522 = vmatprep.subr.mxu0 0.0
    %1523 = vmatpush2.msra.mxu0 0.0
    %1524 = vmatprep.subr.mxu0 0.0
    %1525 = vmatpush2.msra.mxu0 0.0
    %1526 = vmatprep.subr.mxu0 0.0
    %1527 = vmatpush2.msra.mxu0 0.0
    %1528 = vmatprep.subr.mxu0 0.0
    %1529 = vmatpush2.msra.mxu0 0.0
    %1530 = vmatprep.subr.mxu0 0.0
    %1531 = vmatpush2.msra.mxu0 0.0
    %1532 = vmatprep.subr.mxu0 0.0
    %1533 = vmatpush2.msra.mxu0 0.0
    %1534 = vmatprep.subr.mxu0 0.0
    %1535 = vmatpush2.msra.mxu0 0.0
    %1536 = vmatprep.subr.mxu0 0.0
    %1537 = vmatpush2.msra.mxu0 0.0
    %1538 = vmatprep.subr.mxu0 0.0
    %1539 = vmatpush2.msra.mxu0 0.0
    %1540 = vmatprep.subr.mxu0 0.0
    %1541 = vmatpush2.msra.mxu0 0.0
    %1542 = vmatprep.subr.mxu0 0.0
    %1543 = vmatpush2.msra.mxu0 0.0
    %1544 = vmatprep.subr.mxu0 0.0
    %1545 = vmatpush2.msra.mxu0 0.0
    %1546 = vmatprep.subr.mxu0 0.0
    %1547 = vmatpush2.msra.mxu0 0.0
    %1548 = vmatprep.mubr.f32.mxu0 0.0
    %1549 = vmatmul.mubr.f32.gmra.mxu0 %v1482
    %v1550 = vpop.f32.mrf.mxu0
    %v1551 = vadd.f32 %v1480, %v1550
    %v1552 = vpop.f32.mrf.mxu0
    %1553 = vdwg.mxu0
    %v1554 = vsel %vm186, %v1551, -inf
    %1555 = vmax.xlane.f32.xlu0 %v1554
    %v1556 = vpop.xlane.xlu0 %1555
    %v1557 = vlaneseq
    %v1558 = vand.u32 %v1557, 127
    %vm1559 = vcmp.eq.f32.partialorder %v1551, %v1556
    %v1560 = vsel %vm1559, %v1558, 8
    %v1561 = vsel %vm186, %v1560, 2147483647
    %v1562 = vand.u32 %v1561, 65535
    %v1563 = vshra.s32 %v1561, 16
    %v1564 = vcvt.s32.f32 %v1562
    %v1565 = vcvt.s32.f32 %v1563
    %1566 = vmin.xlane.f32.xlu0 %v1565
    %v1567 = vpop.xlane.xlu0 %1566
    %vm1568 = vcmp.eq.f32.partialorder %v1565, %v1567
    %v1569 = vsel %vm1568, %v1564, inf
    %1570 = vmin.xlane.f32.xlu0 %v1569
    %v1571 = vpop.xlane.xlu0 %1570
    %v1572 = vcvt.f32.s32 %v1571
    %v1573 = vcvt.f32.s32 %v1567
    %v1574 = vshll.u32 %v1573, 16
    %v1575 = vadd.s32 %v1574, %v1572
    %vm1576 = vcmp.eq.s32.totalorder %v1558, %v1575
    %v1577 = vsel %vm1576, 1, 0
    %v1578 = vcvt.s32.f32 %v1577
    %vm1579 = vcmask 130112
    %v1580 = vsel %vm1579, %v1551, -inf
    %1581 = vmax.xlane.f32.xlu0 %v1580
    %v1582 = vpop.xlane.xlu0 %1581
    %vm1583 = vcmp.eq.f32.partialorder %v1551, %v1582
    %1584 = vrot.lane.b32.xlu0 %v1558, 8
    %v1585 = vpop.permute.xlu0 %1584
    %v1586 = vsel %vm1583, %v1585, 8
    %v1587 = vsel %vm1579, %v1586, 2147483647
    %v1588 = vand.u32 %v1587, 65535
    %v1589 = vshra.s32 %v1587, 16
    %v1590 = vcvt.s32.f32 %v1588
    %v1591 = vcvt.s32.f32 %v1589
    %1592 = vmin.xlane.f32.xlu0 %v1591
    %v1593 = vpop.xlane.xlu0 %1592
    %vm1594 = vcmp.eq.f32.partialorder %v1591, %v1593
    %v1595 = vsel %vm1594, %v1590, inf
    %1596 = vmin.xlane.f32.xlu0 %v1595
    %v1597 = vpop.xlane.xlu0 %1596
    %v1598 = vcvt.f32.s32 %v1597
    %v1599 = vcvt.f32.s32 %v1593
    %v1600 = vshll.u32 %v1599, 16
    %v1601 = vadd.s32 %v1600, %v1598
    %vm1602 = vcmp.eq.s32.totalorder %v1558, %v1601
    %v1603 = vsel %vm1602, 1, 0
    %v1604 = vcvt.s32.f32 %v1603
    %vm1605 = vcmask 195712
    %v1606 = vsel %vm1605, %v1551, -inf
    %1607 = vmax.xlane.f32.xlu0 %v1606
    %v1608 = vpop.xlane.xlu0 %1607
    %vm1609 = vcmp.eq.f32.partialorder %v1551, %v1608
    %1610 = vrot.lane.b32.xlu0 %v1558, 16
    %v1611 = vpop.permute.xlu0 %1610
    %v1612 = vsel %vm1609, %v1611, 8
    %v1613 = vsel %vm1605, %v1612, 2147483647
    %v1614 = vand.u32 %v1613, 65535
    %v1615 = vshra.s32 %v1613, 16
    %v1616 = vcvt.s32.f32 %v1614
    %v1617 = vcvt.s32.f32 %v1615
    %1618 = vmin.xlane.f32.xlu0 %v1617
    %v1619 = vpop.xlane.xlu0 %1618
    %vm1620 = vcmp.eq.f32.partialorder %v1617, %v1619
    %v1621 = vsel %vm1620, %v1616, inf
    %1622 = vmin.xlane.f32.xlu0 %v1621
    %v1623 = vpop.xlane.xlu0 %1622
    %v1624 = vcvt.f32.s32 %v1623
    %v1625 = vcvt.f32.s32 %v1619
    %v1626 = vshll.u32 %v1625, 16
    %v1627 = vadd.s32 %v1626, %v1624
    %vm1628 = vcmp.eq.s32.totalorder %v1558, %v1627
    %v1629 = vsel %vm1628, 1, 0
    %v1630 = vcvt.s32.f32 %v1629
    %vm1631 = vcmask 261312
    %v1632 = vsel %vm1631, %v1551, -inf
    %1633 = vmax.xlane.f32.xlu0 %v1632
    %v1634 = vpop.xlane.xlu0 %1633
    %vm1635 = vcmp.eq.f32.partialorder %v1551, %v1634
    %1636 = vrot.lane.b32.xlu0 %v1558, 24
    %v1637 = vpop.permute.xlu0 %1636
    %v1638 = vsel %vm1635, %v1637, 8
    %v1639 = vsel %vm1631, %v1638, 2147483647
    %v1640 = vand.u32 %v1639, 65535
    %v1641 = vshra.s32 %v1639, 16
    %v1642 = vcvt.s32.f32 %v1640
    %v1643 = vcvt.s32.f32 %v1641
    %1644 = vmin.xlane.f32.xlu0 %v1643
    %v1645 = vpop.xlane.xlu0 %1644
    %vm1646 = vcmp.eq.f32.partialorder %v1643, %v1645
    %v1647 = vsel %vm1646, %v1642, inf
    %1648 = vmin.xlane.f32.xlu0 %v1647
    %v1649 = vpop.xlane.xlu0 %1648
    %v1650 = vcvt.f32.s32 %v1649
    %v1651 = vcvt.f32.s32 %v1645
    %v1652 = vshll.u32 %v1651, 16
    %v1653 = vadd.s32 %v1652, %v1650
    %vm1654 = vcmp.eq.s32.totalorder %v1558, %v1653
    %v1655 = vsel %vm1654, 1, 0
    %v1656 = vcvt.s32.f32 %v1655
    %1658 = vrot.lane.b32.xlu0 %v1578, 32
    %v1659 = vpop.permute.xlu0 %1658
    %1662 = vrot.lane.b32.xlu0 %v1604, 40
    %v1663 = vpop.permute.xlu0 %1662
    %1666 = vrot.lane.b32.xlu0 %v1630, 48
    %v1667 = vpop.permute.xlu0 %1666
    %1670 = vrot.lane.b32.xlu0 %v1656, 56
    %v1671 = vpop.permute.xlu0 %1670
    %1673 = vrot.lane.b32.xlu0 %v1384, 64
    %v1674 = vpop.permute.xlu0 %1673
    %v1676 = vsel %vm112, %v1551, %v1659
    %vm1677 = vcmask 326656
    %v1678 = vsel %vm1677, %v1676, %v1663
    %vm1679 = vcmask 392192
    %v1680 = vsel %vm1679, %v1678, %v1667
    %vm1681 = vcmask 457728
    %v1682 = vsel %vm1681, %v1680, %v1671
    %v1683 = vsel %vm472, %v1682, %v1674
    %1684 = vst [vmem:[#allocation11] sm:$0xff] %v1683
    // Predicated region
    $region70: #{tpu_custom_call.1} parent=1 // pred_check
      _
    $region71: #{tpu_custom_call.1} parent=1 // pred_check_branch
      %1686 = sbr.rel (0) target = $region73
    $region72: #{tpu_custom_call.1} parent=1 // pred_region
      %s1688 = ssub.s32 128, 128
      %1689 = vsyncadd [#allocation4], %s1688
      %s1691 = sshll.u32 [#allocation11], 4
      %s1692 = int_to_ptr.vmem [resolvable:$true] %s1691
      %1694 = dma.vmem_to_hbm [thread:$0]  %s1692, 128, %s12, [#allocation4]
    $region73: #{tpu_custom_call.1} parent=1 // pred_fallthru
      _
    // Predicated region
    $region74: #{tpu_custom_call.1} parent=1 // pred_check
      _
    $region75: #{tpu_custom_call.1} parent=1 // pred_check_branch
      %1696 = sbr.rel (0) target = $region77
    $region76: #{tpu_custom_call.1} parent=1 // pred_region
      %1697 = dma.done [#allocation4], 128
    $region77: #{tpu_custom_call.1} parent=1 // pred_fallthru
      _
    %1698 = vsyncpa [#allocation3], 1
    %1699 = vsyncpa [#allocation6], 1
    %1700 = vsyncpa [#allocation9], 1
    %1701 = vsyncpa [#allocation4], 1

</llo_original>
